<compile_context>
chip_gen: v7x
topology: tpu7x:2x2x1
jax: 0.10.0
libtpu: 0.0.40
codegen_flags: <defaults>
</compile_context>

<pallas_src>
import functools

import jax
import jax.numpy as jnp
from jax.experimental import pallas as pl
from jax.experimental.pallas import tpu as pltpu

_LANE = 128


def _round_up(n, m):
    return (n + m - 1) // m * m


def _round_down(n, m):
    return (n // m) * m


def _vmem_capacity_bytes():
    """Physical VMEM per TensorCore; conservative default if the query is unavailable."""
    try:
        cap = getattr(pltpu.get_tpu_info(), "vmem_capacity_bytes", None)
        if cap:
            return int(cap)
    except Exception:
        pass
    return 64 * 1024 * 1024  # v7x per-core VMEM (smallest of the supported generations)


def reference_forward(x, p, out_dtype=None):
    """Pure-JAX f32 reference (mirrors PyTorch Autoencoder.forward with the MLP enc/dec)."""
    xf = x.astype(jnp.float32)
    h = jnp.maximum(xf @ p["we1"] + p["be1"], 0.0)
    z = h @ p["we2"] + p["be2"]
    h2 = jnp.maximum(z @ p["wd1"] + p["bd1"], 0.0)
    x_hat = h2 @ p["wd2"] + p["bd2"]
    if out_dtype is not None:
        x_hat, z = x_hat.astype(out_dtype), z.astype(out_dtype)
    return x_hat, z


def _autoencoder_kernel(
    x_ref,
    we1_ref, be1_ref, we2_ref, be2_ref,   # encoder params (VMEM-resident, Buffered(1))
    wd1_ref, bd1_ref, wd2_ref, bd2_ref,   # decoder params (VMEM-resident, Buffered(1))
    xhat_ref, z_ref,                       # outputs (lane-dense padded tiles)
    *, compute_dtype,
):
    # MXU inputs in compute_dtype (bf16); all accumulation in f32.
    x = x_ref[...].astype(compute_dtype)

    # ---- encoder ----
    h = jnp.dot(x, we1_ref[...], preferred_element_type=jnp.float32) + be1_ref[...]
    h = jnp.maximum(h, 0.0).astype(compute_dtype)
    z = jnp.dot(h, we2_ref[...], preferred_element_type=jnp.float32) + be2_ref[...]
    z_ref[...] = z.astype(z_ref.dtype)           # latent stored in the output dtype

    # ---- decoder ----
    h2 = jnp.dot(z.astype(compute_dtype), wd1_ref[...],
                 preferred_element_type=jnp.float32) + bd1_ref[...]
    h2 = jnp.maximum(h2, 0.0).astype(compute_dtype)
    x_hat = jnp.dot(h2, wd2_ref[...], preferred_element_type=jnp.float32) + bd2_ref[...]
    xhat_ref[...] = x_hat.astype(xhat_ref.dtype)


def _const_spec(shape):
    """Constant-index (VMEM-resident) operand; single-buffered since it is DMA'd once."""
    idx = lambda *i: (0,) * len(shape)
    try:
        return pl.BlockSpec(shape, idx, pipeline_mode=pl.Buffered(1))
    except (TypeError, AttributeError):   # older jax without pipeline_mode / Buffered
        return pl.BlockSpec(shape, idx)


def make_autoencoder_forward(params, *, compute_dtype=jnp.bfloat16, block_b=1024,
                             use_small_fallback=True):
    """Pads/casts the params once and returns a jitted forward(x) -> (x_hat, z)."""
    D, H = params["we1"].shape
    Z = params["we2"].shape[1]
    Dp, Hp, Zp = (_round_up(d, _LANE) for d in (D, H, Z))
    c_bytes = jnp.dtype(compute_dtype).itemsize
    sub = 16 if c_bytes == 2 else 8          # bf16 vreg packs 16 sublanes

    def pad2(a, rows, cols, dt):
        a = jnp.asarray(a, dt)
        return jnp.pad(a, ((0, rows - a.shape[0]), (0, cols - a.shape[1])))

    # One-time pad + cast (zero rows/cols keep the math exact).  NOT done per call.
    we1 = pad2(params["we1"], Dp, Hp, compute_dtype)
    be1 = pad2(params["be1"], 1, Hp, jnp.float32)
    we2 = pad2(params["we2"], Hp, Zp, compute_dtype)
    be2 = pad2(params["be2"], 1, Zp, jnp.float32)
    wd1 = pad2(params["wd1"], Zp, Hp, compute_dtype)
    bd1 = pad2(params["bd1"], 1, Hp, jnp.float32)
    wd2 = pad2(params["wd2"], Hp, Dp, compute_dtype)
    bd2 = pad2(params["bd2"], 1, Dp, jnp.float32)

    weight_bytes = c_bytes * (Dp * Hp + Hp * Zp + Zp * Hp + Hp * Dp)
    bias_bytes = 4 * (2 * Hp + Zp + Dp)
    phys_vmem = _vmem_capacity_bytes()
    budget = int(0.45 * phys_vmem)           # headroom for compiler scratch / temps

    kernel = functools.partial(_autoencoder_kernel, compute_dtype=compute_dtype)

    @jax.jit
    def forward(x):
        B, Dx = x.shape
        assert Dx == D, f"expected input dim {D}, got {Dx}"
        out_dtype = x.dtype

        # Tiny problems: padding every dim to the 128-lane MXU tile is >90% zeros
        # and launch/pad overhead dominates -> plain XLA is faster.
        if use_small_fallback and (B < 4 * sub or max(D, H, Z) < _LANE):
            return reference_forward(x, params, out_dtype=out_dtype)

        x_bytes = jnp.dtype(out_dtype).itemsize
        # Per-row VMEM cost: double-buffered x / x_hat / z tiles + live f32
        # intermediates (h, z, h2, x_hat).  Weights/biases are fixed (Buffered(1)).
        per_row = (2 * Dp * x_bytes                 # x tile      (2 pipeline buffers)
                   + 2 * Dp * x_bytes               # x_hat tile  (2 pipeline buffers)
                   + 2 * Zp * x_bytes               # z tile      (2 pipeline buffers)
                   + 4 * (2 * Hp + Zp + Dp))        # f32 intermediates
        fixed = weight_bytes + bias_bytes

        bp_min = _round_up(B, sub)
        avail = max(budget - fixed, sub * per_row)
        tb = max(sub, min(block_b, _round_down(avail // per_row, sub), bp_min))
        if bp_min >= 2 * sub:                       # >=2 grid tiles so megacore engages
            tb = min(tb, max(sub, _round_down(bp_min // 2, sub)))
        Bp = _round_up(B, tb)
        grid = (Bp // tb,)

        # Skip the pad entirely in the aligned common case (no extra HBM copy).
        xp = x if (Bp, Dp) == (B, D) else jnp.pad(x, ((0, Bp - B), (0, Dp - D)))

        in_specs = [
            pl.BlockSpec((tb, Dp), lambda i: (i, 0)),      # x tile (pipelined)
            _const_spec((Dp, Hp)), _const_spec((1, Hp)),
            _const_spec((Hp, Zp)), _const_spec((1, Zp)),
            _const_spec((Zp, Hp)), _const_spec((1, Hp)),
            _const_spec((Hp, Dp)), _const_spec((1, Dp)),
        ]
        out_specs = (
            pl.BlockSpec((tb, Dp), lambda i: (i, 0)),      # x_hat tile (lane-dense)
            pl.BlockSpec((tb, Zp), lambda i: (i, 0)),      # z tile (lane-dense)
        )
        out_shape = (
            jax.ShapeDtypeStruct((Bp, Dp), out_dtype),
            jax.ShapeDtypeStruct((Bp, Zp), out_dtype),
        )

        flops = 2 * Bp * (Dp * Hp + Hp * Zp + Zp * Hp + Hp * Dp)
        bytes_accessed = (Bp * Dp * x_bytes                    # x read
                          + weight_bytes + bias_bytes          # params (DMA'd once)
                          + Bp * (Dp + Zp) * x_bytes)          # outputs
        cost = pl.CostEstimate(flops=flops, transcendentals=0,
                               bytes_accessed=bytes_accessed)

        est = fixed + tb * per_row
        vmem_limit = int(min(0.9 * phys_vmem, max(1.3 * est, 16 * 1024 * 1024)))

        x_hat_p, z_p = pl.pallas_call(
            kernel,
            grid=grid,
            in_specs=in_specs,
            out_specs=out_specs,
            out_shape=out_shape,
            compiler_params=pltpu.CompilerParams(
                dimension_semantics=("parallel",),   # independent batch tiles
                vmem_limit_bytes=vmem_limit,
            ),
            cost_estimate=cost,
        )(xp, we1, be1, we2, be2, wd1, bd1, wd2, bd2)

        x_hat = x_hat_p if (Bp, Dp) == (B, D) else x_hat_p[:B, :D]
        z = z_p if (Bp, Zp) == (B, Z) else z_p[:B, :Z]
        return x_hat, z

    return forward


def init_params(key, D, H, Z, dtype=jnp.float32):
    ks = jax.random.split(key, 8)
    scale = 0.1
    return {
        # encoder: Linear(D,H), Linear(H,Z)  -- weights stored (in, out) = PyTorch W.T
        "we1": scale * jax.random.normal(ks[0], (D, H), dtype),
        "be1": scale * jax.random.normal(ks[1], (1, H), dtype),
        "we2": scale * jax.random.normal(ks[2], (H, Z), dtype),
        "be2": scale * jax.random.normal(ks[3], (1, Z), dtype),
        # decoder: Linear(Z,H), Linear(H,D)
        "wd1": scale * jax.random.normal(ks[4], (Z, H), dtype),
        "bd1": scale * jax.random.normal(ks[5], (1, H), dtype),
        "wd2": scale * jax.random.normal(ks[6], (H, D), dtype),
        "bd2": scale * jax.random.normal(ks[7], (1, D), dtype),
    }


if __name__ == "__main__":
    key = jax.random.PRNGKey(0)
    kx, kp, kx2, kp2 = jax.random.split(key, 4)

    # --- Pallas kernel path (small, deliberately unaligned dims to exercise padding) ---
    B, D, H, Z = 200, 160, 320, 96
    x = jax.random.normal(kx, (B, D), jnp.float32)
    params = init_params(kp, D, H, Z)
    forward = make_autoencoder_forward(params)
    x_hat, z = forward(x)
    jax.block_until_ready((x_hat, z))
    assert x_hat.shape == (B, D) and z.shape == (B, Z)
    x_hat_ref, z_ref = reference_forward(x, params)
    # bf16 MXU inputs with f32 accumulation -> loosened tolerances.
    assert jnp.allclose(x_hat.astype(jnp.float32), x_hat_ref, atol=5e-2, rtol=5e-2)
    assert jnp.allclose(z.astype(jnp.float32), z_ref, atol=5e-2, rtol=5e-2)

    # --- Tiny-shape path (pure-XLA fallback; 128-lane padding would be ~all zeros) ---
    Bs, Ds, Hs, Zs = 8, 32, 64, 16
    xs = jax.random.normal(kx2, (Bs, Ds), jnp.float32)
    params_s = init_params(kp2, Ds, Hs, Zs)
    forward_s = make_autoencoder_forward(params_s)
    x_hat_s, z_s = forward_s(xs)
    jax.block_until_ready((x_hat_s, z_s))
    assert x_hat_s.shape == (Bs, Ds) and z_s.shape == (Bs, Zs)
    x_hat_s_ref, z_s_ref = reference_forward(xs, params_s)
    assert jnp.allclose(x_hat_s, x_hat_s_ref, atol=1e-5, rtol=1e-5)
    assert jnp.allclose(z_s, z_s_ref, atol=1e-5, rtol=1e-5)

    print("KERNEL_OK")
</pallas_src>

<mosaic_0001>
module attributes {stable_mosaic.version = 11 : i64} {
  func.func @_autoencoder_kernel(%arg0: i32, %arg1: memref<96x256xf32, #tpu.memory_space<vmem>>, %arg2: memref<256x384xbf16, #tpu.memory_space<vmem>>, %arg3: memref<1x384xf32, #tpu.memory_space<vmem>>, %arg4: memref<384x128xbf16, #tpu.memory_space<vmem>>, %arg5: memref<1x128xf32, #tpu.memory_space<vmem>>, %arg6: memref<128x384xbf16, #tpu.memory_space<vmem>>, %arg7: memref<1x384xf32, #tpu.memory_space<vmem>>, %arg8: memref<384x256xbf16, #tpu.memory_space<vmem>>, %arg9: memref<1x256xf32, #tpu.memory_space<vmem>>, %arg10: memref<96x256xf32, #tpu.memory_space<vmem>>, %arg11: memref<96x128xf32, #tpu.memory_space<vmem>>) attributes {dimension_semantics = [#tpu.dimension_semantics<parallel>], iteration_bounds = array<i64: 3>, scalar_prefetch = 0 : i64, scratch_operands = 0 : i64, tpu.core_type = #tpu.core_type<tc>, window_params = [{transform_indices = @transform_0, window_bounds = array<i64: 96, 256>}, {pipeline_mode = #tpu.pipeline_mode<synchronous>, transform_indices = @transform_1, window_bounds = array<i64: 256, 384>}, {pipeline_mode = #tpu.pipeline_mode<synchronous>, transform_indices = @transform_2, window_bounds = array<i64: 1, 384>}, {pipeline_mode = #tpu.pipeline_mode<synchronous>, transform_indices = @transform_3, window_bounds = array<i64: 384, 128>}, {pipeline_mode = #tpu.pipeline_mode<synchronous>, transform_indices = @transform_4, window_bounds = array<i64: 1, 128>}, {pipeline_mode = #tpu.pipeline_mode<synchronous>, transform_indices = @transform_5, window_bounds = array<i64: 128, 384>}, {pipeline_mode = #tpu.pipeline_mode<synchronous>, transform_indices = @transform_6, window_bounds = array<i64: 1, 384>}, {pipeline_mode = #tpu.pipeline_mode<synchronous>, transform_indices = @transform_7, window_bounds = array<i64: 384, 256>}, {pipeline_mode = #tpu.pipeline_mode<synchronous>, transform_indices = @transform_8, window_bounds = array<i64: 1, 256>}, {transform_indices = @transform_9, window_bounds = array<i64: 96, 256>}, {transform_indices = @transform_10, window_bounds = array<i64: 96, 128>}]} {
    %c0 = arith.constant 0 : index
    %c0_0 = arith.constant 0 : index
    %0 = vector.load %arg1[%c0, %c0_0] : memref<96x256xf32, #tpu.memory_space<vmem>>, vector<96x256xf32>
    %1 = arith.truncf %0 : vector<96x256xf32> to vector<96x256xbf16>
    %c0_1 = arith.constant 0 : index
    %c0_2 = arith.constant 0 : index
    %2 = vector.load %arg2[%c0_1, %c0_2] : memref<256x384xbf16, #tpu.memory_space<vmem>>, vector<256x384xbf16>
    %cst = arith.constant dense<0.000000e+00> : vector<96x384xf32>
    %3 = tpu.matmul %1, %2, %cst {dimension_numbers = #tpu.dot_dimension_numbers<[1], [0], [0], [1], [0, 0, 1, 1], [], []>} : vector<96x256xbf16>, vector<256x384xbf16>, vector<96x384xf32> -> vector<96x384xf32>
    %c0_3 = arith.constant 0 : index
    %c0_4 = arith.constant 0 : index
    %4 = vector.load %arg3[%c0_3, %c0_4] : memref<1x384xf32, #tpu.memory_space<vmem>>, vector<1x384xf32>
    %5 = vector.broadcast %4 : vector<1x384xf32> to vector<96x384xf32>
    %6 = arith.addf %3, %5 : vector<96x384xf32>
    %cst_5 = arith.constant 0.000000e+00 : f32
    %7 = vector.broadcast %cst_5 : f32 to vector<96x384xf32>
    %8 = arith.maximumf %6, %7 : vector<96x384xf32>
    %9 = arith.truncf %8 : vector<96x384xf32> to vector<96x384xbf16>
    %c0_6 = arith.constant 0 : index
    %c0_7 = arith.constant 0 : index
    %10 = vector.load %arg4[%c0_6, %c0_7] : memref<384x128xbf16, #tpu.memory_space<vmem>>, vector<384x128xbf16>
    %cst_8 = arith.constant dense<0.000000e+00> : vector<96x128xf32>
    %11 = tpu.matmul %9, %10, %cst_8 {dimension_numbers = #tpu.dot_dimension_numbers<[1], [0], [0], [1], [0, 0, 1, 1], [], []>} : vector<96x384xbf16>, vector<384x128xbf16>, vector<96x128xf32> -> vector<96x128xf32>
    %c0_9 = arith.constant 0 : index
    %c0_10 = arith.constant 0 : index
    %12 = vector.load %arg5[%c0_9, %c0_10] : memref<1x128xf32, #tpu.memory_space<vmem>>, vector<1x128xf32>
    %13 = vector.broadcast %12 : vector<1x128xf32> to vector<96x128xf32>
    %14 = arith.addf %11, %13 : vector<96x128xf32>
    %c0_11 = arith.constant 0 : index
    %c0_12 = arith.constant 0 : index
    %15 = vector.load %arg11[%c0_11, %c0_12] : memref<96x128xf32, #tpu.memory_space<vmem>>, vector<96x128xf32>
    tpu.vector_store %arg11[%c0_11, %c0_12], %14 {strides = array<i32>} : memref<96x128xf32, #tpu.memory_space<vmem>>, vector<96x128xf32>,
    %16 = arith.truncf %14 : vector<96x128xf32> to vector<96x128xbf16>
    %c0_13 = arith.constant 0 : index
    %c0_14 = arith.constant 0 : index
    %17 = vector.load %arg6[%c0_13, %c0_14] : memref<128x384xbf16, #tpu.memory_space<vmem>>, vector<128x384xbf16>
    %cst_15 = arith.constant dense<0.000000e+00> : vector<96x384xf32>
    %18 = tpu.matmul %16, %17, %cst_15 {dimension_numbers = #tpu.dot_dimension_numbers<[1], [0], [0], [1], [0, 0, 1, 1], [], []>} : vector<96x128xbf16>, vector<128x384xbf16>, vector<96x384xf32> -> vector<96x384xf32>
    %c0_16 = arith.constant 0 : index
    %c0_17 = arith.constant 0 : index
    %19 = vector.load %arg7[%c0_16, %c0_17] : memref<1x384xf32, #tpu.memory_space<vmem>>, vector<1x384xf32>
    %20 = vector.broadcast %19 : vector<1x384xf32> to vector<96x384xf32>
    %21 = arith.addf %18, %20 : vector<96x384xf32>
    %cst_18 = arith.constant 0.000000e+00 : f32
    %22 = vector.broadcast %cst_18 : f32 to vector<96x384xf32>
    %23 = arith.maximumf %21, %22 : vector<96x384xf32>
    %24 = arith.truncf %23 : vector<96x384xf32> to vector<96x384xbf16>
    %c0_19 = arith.constant 0 : index
    %c0_20 = arith.constant 0 : index
    %25 = vector.load %arg8[%c0_19, %c0_20] : memref<384x256xbf16, #tpu.memory_space<vmem>>, vector<384x256xbf16>
    %cst_21 = arith.constant dense<0.000000e+00> : vector<96x256xf32>
    %26 = tpu.matmul %24, %25, %cst_21 {dimension_numbers = #tpu.dot_dimension_numbers<[1], [0], [0], [1], [0, 0, 1, 1], [], []>} : vector<96x384xbf16>, vector<384x256xbf16>, vector<96x256xf32> -> vector<96x256xf32>
    %c0_22 = arith.constant 0 : index
    %c0_23 = arith.constant 0 : index
    %27 = vector.load %arg9[%c0_22, %c0_23] : memref<1x256xf32, #tpu.memory_space<vmem>>, vector<1x256xf32>
    %28 = vector.broadcast %27 : vector<1x256xf32> to vector<96x256xf32>
    %29 = arith.addf %26, %28 : vector<96x256xf32>
    %c0_24 = arith.constant 0 : index
    %c0_25 = arith.constant 0 : index
    %30 = vector.load %arg10[%c0_24, %c0_25] : memref<96x256xf32, #tpu.memory_space<vmem>>, vector<96x256xf32>
    tpu.vector_store %arg10[%c0_24, %c0_25], %29 {strides = array<i32>} : memref<96x256xf32, #tpu.memory_space<vmem>>, vector<96x256xf32>,
    return
  }
  func.func @transform_0(%arg0: i32) -> (i32, i32) {
    %c0_i32 = arith.constant 0 : i32
    %c0_i32_0 = arith.constant 0 : i32
    return %arg0, %c0_i32 : i32, i32
  }
  func.func @transform_1(%arg0: i32) -> (i32, i32) {
    %c0_i32 = arith.constant 0 : i32
    %c0_i32_0 = arith.constant 0 : i32
    %c0_i32_1 = arith.constant 0 : i32
    return %c0_i32, %c0_i32_0 : i32, i32
  }
  func.func @transform_2(%arg0: i32) -> (i32, i32) {
    %c0_i32 = arith.constant 0 : i32
    %c0_i32_0 = arith.constant 0 : i32
    %c0_i32_1 = arith.constant 0 : i32
    return %c0_i32, %c0_i32_0 : i32, i32
  }
  func.func @transform_3(%arg0: i32) -> (i32, i32) {
    %c0_i32 = arith.constant 0 : i32
    %c0_i32_0 = arith.constant 0 : i32
    %c0_i32_1 = arith.constant 0 : i32
    return %c0_i32, %c0_i32_0 : i32, i32
  }
  func.func @transform_4(%arg0: i32) -> (i32, i32) {
    %c0_i32 = arith.constant 0 : i32
    %c0_i32_0 = arith.constant 0 : i32
    %c0_i32_1 = arith.constant 0 : i32
    return %c0_i32, %c0_i32_0 : i32, i32
  }
  func.func @transform_5(%arg0: i32) -> (i32, i32) {
    %c0_i32 = arith.constant 0 : i32
    %c0_i32_0 = arith.constant 0 : i32
    %c0_i32_1 = arith.constant 0 : i32
    return %c0_i32, %c0_i32_0 : i32, i32
  }
  func.func @transform_6(%arg0: i32) -> (i32, i32) {
    %c0_i32 = arith.constant 0 : i32
    %c0_i32_0 = arith.constant 0 : i32
    %c0_i32_1 = arith.constant 0 : i32
    return %c0_i32, %c0_i32_0 : i32, i32
  }
  func.func @transform_7(%arg0: i32) -> (i32, i32) {
    %c0_i32 = arith.constant 0 : i32
    %c0_i32_0 = arith.constant 0 : i32
    %c0_i32_1 = arith.constant 0 : i32
    return %c0_i32, %c0_i32_0 : i32, i32
  }
  func.func @transform_8(%arg0: i32) -> (i32, i32) {
    %c0_i32 = arith.constant 0 : i32
    %c0_i32_0 = arith.constant 0 : i32
    %c0_i32_1 = arith.constant 0 : i32
    return %c0_i32, %c0_i32_0 : i32, i32
  }
  func.func @transform_9(%arg0: i32) -> (i32, i32) {
    %c0_i32 = arith.constant 0 : i32
    %c0_i32_0 = arith.constant 0 : i32
    return %arg0, %c0_i32 : i32, i32
  }
  func.func @transform_10(%arg0: i32) -> (i32, i32) {
    %c0_i32 = arith.constant 0 : i32
    %c0_i32_0 = arith.constant 0 : i32
    return %arg0, %c0_i32 : i32, i32
  }
}

</mosaic_0001>

<llo_original>
// kernel: forward.1
$region0: #{forward.1}
  #allocation0 [shape = 'u32[]', space=smem, size = 0x4, offset = 0x4, fixed_abs, tag = 'smem constant byte address 0x4 - core index']
  #allocation1 [shape = 'u32[144,128]{1,0:T(1,128)}', space=vmem, size = 0x12000, scoped, tag = 'internal scratch']
  %s0 = inlined_call_operand.vmem [shape: f32[288,256], index: 0, kind: input, shape index: {}]
  %s1 = inlined_call_operand.vmem [shape: bf16[256,384], index: 1, kind: input, shape index: {}]
  %s2 = inlined_call_operand.vmem [shape: f32[1,384], index: 2, kind: input, shape index: {}]
  %s3 = inlined_call_operand.vmem [shape: bf16[384,128], index: 3, kind: input, shape index: {}]
  %s4 = inlined_call_operand.vmem [shape: f32[1,128], index: 4, kind: input, shape index: {}]
  %s5 = inlined_call_operand.vmem [shape: bf16[128,384], index: 5, kind: input, shape index: {}]
  %s6 = inlined_call_operand.vmem [shape: f32[1,384], index: 6, kind: input, shape index: {}]
  %s7 = inlined_call_operand.vmem [shape: bf16[384,256], index: 7, kind: input, shape index: {}]
  %s8 = inlined_call_operand.vmem [shape: f32[1,256], index: 8, kind: input, shape index: {}]
  %s9 = inlined_call_operand.vmem [shape: f32[288,256], index: 9, kind: output, shape index: {0}]
  %s10 = inlined_call_operand.vmem [shape: f32[288,128], index: 10, kind: output, shape index: {1}]
  %11 = xla_tuple %s9, %s10
  %s12 = sld [smem:[#allocation0]]
  $region77: #{forward.1} parent=0
    _
  %s14 = ssub.s32 1, %s12
  %s15 = scalar_select 0, %s14, %s12
  loop: start=0, step=1, limit=5
  $region2: #{forward.1} parent=0 // loop_pre_header
    _
  $region3: #{forward.1} parent=0 // loop_header
    %s17 = sphi 0, %s21
    %p18 = scmp.ge.s32.totalorder %s17, 5
    %s27 = sphi 0, %s29
    %s30 = sphi 0, %s27
    %s31 = sphi 0, %s30
    %s47 = sphi 0, %s31
    %s51 = sphi 0, %s51
    %s53 = sphi 0, %s51
    %s54 = sphi 0, %s53
    %s68 = sphi 0, %s54
    %s72 = sphi 0, %s72
    %s74 = sphi 0, %s72
    %s75 = sphi 0, %s74
    %s89 = sphi 0, %s75
    %s93 = sphi 0, %s93
    %s95 = sphi 0, %s93
    %s96 = sphi 0, %s95
    %s110 = sphi 0, %s96
    %s114 = sphi 0, %s114
    %s116 = sphi 0, %s114
    %s117 = sphi 0, %s116
    %s131 = sphi 0, %s117
    %s135 = sphi 0, %s135
    %s137 = sphi 0, %s135
    %s138 = sphi 0, %s137
    %s152 = sphi 0, %s138
    %s156 = sphi 0, %s156
    %s158 = sphi 0, %s156
    %s159 = sphi 0, %s158
    %s173 = sphi 0, %s159
    %s177 = sphi 0, %s177
    %s179 = sphi 0, %s177
    %s180 = sphi 0, %s179
    %s194 = sphi 0, %s180
    %s198 = sphi 0, %s198
    %s200 = sphi 0, %s198
    %s201 = sphi 0, %s200
    %s215 = sphi 0, %s201
    %s221 = sphi 0, %s223
    %s224 = sphi 0, %s221
    %s225 = sphi 0, %s224
    %s241 = sphi 0, %s225
    %s247 = sphi 0, %s249
    %s250 = sphi 0, %s247
    %s251 = sphi 0, %s250
    %s267 = sphi 0, %s251
  $region4: #{forward.1} parent=0 // loop_header_branch
    %20 = sbr.rel (%p18) target = $region8
  $region5: #{forward.1} parent=0 // loop_body
    %s22 = ssub.s32 %s17, 1
    %s23 = ssub.s32 %s17, 2
    %s24 = sadd.s32 %s17, 1
    %s25 = ssub.s32 %s17, %s24
    %p26 = scmp.eq.s32.totalorder %s25, 0
    %s28 = sadd.s32 %s27, 1
    %s29 = scalar_select %p26, %s27, %s28
    %p32 = pneg %p26
    %p33 = scmp.eq.s32.totalorder %s17, 2
    %p34 = por %p32, %p33
    %p35 = scmp.ne.s32.totalorder %s27, %s30
    %p36 = scmp.eq.s32.totalorder %s17, 0
    %p37 = por %p35, %p36
    %p38 = scmp.ne.s32.totalorder %s27, %s30
    %p39 = scmp.eq.s32.totalorder %s22, 2
    %p40 = por %p38, %p39
    %p41 = scmp.ne.s32.totalorder %s30, %s31
    %p42 = scmp.eq.s32.totalorder %s22, 0
    %p43 = por %p41, %p42
    %p44 = scmp.ne.s32.totalorder %s30, %s31
    %p45 = scmp.eq.s32.totalorder %s23, 2
    %p46 = por %p44, %p45
    %p48 = scmp.ne.s32.totalorder %s31, %s47
    %p49 = scmp.eq.s32.totalorder %s23, 0
    %p50 = por %p48, %p49
    %s52 = sadd.s32 %s51, 1
    %p55 = scmp.eq.s32.totalorder %s17, 2
    %p56 = scmp.ne.s32.totalorder %s51, %s53
    %p57 = scmp.eq.s32.totalorder %s17, 0
    %p58 = por %p56, %p57
    %p59 = scmp.ne.s32.totalorder %s51, %s53
    %p60 = scmp.eq.s32.totalorder %s22, 2
    %p61 = por %p59, %p60
    %p62 = scmp.ne.s32.totalorder %s53, %s54
    %p63 = scmp.eq.s32.totalorder %s22, 0
    %p64 = por %p62, %p63
    %p65 = scmp.ne.s32.totalorder %s53, %s54
    %p66 = scmp.eq.s32.totalorder %s23, 2
    %p67 = por %p65, %p66
    %p69 = scmp.ne.s32.totalorder %s54, %s68
    %p70 = scmp.eq.s32.totalorder %s23, 0
    %p71 = por %p69, %p70
    %s73 = sadd.s32 %s72, 1
    %p76 = scmp.eq.s32.totalorder %s17, 2
    %p77 = scmp.ne.s32.totalorder %s72, %s74
    %p78 = scmp.eq.s32.totalorder %s17, 0
    %p79 = por %p77, %p78
    %p80 = scmp.ne.s32.totalorder %s72, %s74
    %p81 = scmp.eq.s32.totalorder %s22, 2
    %p82 = por %p80, %p81
    %p83 = scmp.ne.s32.totalorder %s74, %s75
    %p84 = scmp.eq.s32.totalorder %s22, 0
    %p85 = por %p83, %p84
    %p86 = scmp.ne.s32.totalorder %s74, %s75
    %p87 = scmp.eq.s32.totalorder %s23, 2
    %p88 = por %p86, %p87
    %p90 = scmp.ne.s32.totalorder %s75, %s89
    %p91 = scmp.eq.s32.totalorder %s23, 0
    %p92 = por %p90, %p91
    %s94 = sadd.s32 %s93, 1
    %p97 = scmp.eq.s32.totalorder %s17, 2
    %p98 = scmp.ne.s32.totalorder %s93, %s95
    %p99 = scmp.eq.s32.totalorder %s17, 0
    %p100 = por %p98, %p99
    %p101 = scmp.ne.s32.totalorder %s93, %s95
    %p102 = scmp.eq.s32.totalorder %s22, 2
    %p103 = por %p101, %p102
    %p104 = scmp.ne.s32.totalorder %s95, %s96
    %p105 = scmp.eq.s32.totalorder %s22, 0
    %p106 = por %p104, %p105
    %p107 = scmp.ne.s32.totalorder %s95, %s96
    %p108 = scmp.eq.s32.totalorder %s23, 2
    %p109 = por %p107, %p108
    %p111 = scmp.ne.s32.totalorder %s96, %s110
    %p112 = scmp.eq.s32.totalorder %s23, 0
    %p113 = por %p111, %p112
    %s115 = sadd.s32 %s114, 1
    %p118 = scmp.eq.s32.totalorder %s17, 2
    %p119 = scmp.ne.s32.totalorder %s114, %s116
    %p120 = scmp.eq.s32.totalorder %s17, 0
    %p121 = por %p119, %p120
    %p122 = scmp.ne.s32.totalorder %s114, %s116
    %p123 = scmp.eq.s32.totalorder %s22, 2
    %p124 = por %p122, %p123
    %p125 = scmp.ne.s32.totalorder %s116, %s117
    %p126 = scmp.eq.s32.totalorder %s22, 0
    %p127 = por %p125, %p126
    %p128 = scmp.ne.s32.totalorder %s116, %s117
    %p129 = scmp.eq.s32.totalorder %s23, 2
    %p130 = por %p128, %p129
    %p132 = scmp.ne.s32.totalorder %s117, %s131
    %p133 = scmp.eq.s32.totalorder %s23, 0
    %p134 = por %p132, %p133
    %s136 = sadd.s32 %s135, 1
    %p139 = scmp.eq.s32.totalorder %s17, 2
    %p140 = scmp.ne.s32.totalorder %s135, %s137
    %p141 = scmp.eq.s32.totalorder %s17, 0
    %p142 = por %p140, %p141
    %p143 = scmp.ne.s32.totalorder %s135, %s137
    %p144 = scmp.eq.s32.totalorder %s22, 2
    %p145 = por %p143, %p144
    %p146 = scmp.ne.s32.totalorder %s137, %s138
    %p147 = scmp.eq.s32.totalorder %s22, 0
    %p148 = por %p146, %p147
    %p149 = scmp.ne.s32.totalorder %s137, %s138
    %p150 = scmp.eq.s32.totalorder %s23, 2
    %p151 = por %p149, %p150
    %p153 = scmp.ne.s32.totalorder %s138, %s152
    %p154 = scmp.eq.s32.totalorder %s23, 0
    %p155 = por %p153, %p154
    %s157 = sadd.s32 %s156, 1
    %p160 = scmp.eq.s32.totalorder %s17, 2
    %p161 = scmp.ne.s32.totalorder %s156, %s158
    %p162 = scmp.eq.s32.totalorder %s17, 0
    %p163 = por %p161, %p162
    %p164 = scmp.ne.s32.totalorder %s156, %s158
    %p165 = scmp.eq.s32.totalorder %s22, 2
    %p166 = por %p164, %p165
    %p167 = scmp.ne.s32.totalorder %s158, %s159
    %p168 = scmp.eq.s32.totalorder %s22, 0
    %p169 = por %p167, %p168
    %p170 = scmp.ne.s32.totalorder %s158, %s159
    %p171 = scmp.eq.s32.totalorder %s23, 2
    %p172 = por %p170, %p171
    %p174 = scmp.ne.s32.totalorder %s159, %s173
    %p175 = scmp.eq.s32.totalorder %s23, 0
    %p176 = por %p174, %p175
    %s178 = sadd.s32 %s177, 1
    %p181 = scmp.eq.s32.totalorder %s17, 2
    %p182 = scmp.ne.s32.totalorder %s177, %s179
    %p183 = scmp.eq.s32.totalorder %s17, 0
    %p184 = por %p182, %p183
    %p185 = scmp.ne.s32.totalorder %s177, %s179
    %p186 = scmp.eq.s32.totalorder %s22, 2
    %p187 = por %p185, %p186
    %p188 = scmp.ne.s32.totalorder %s179, %s180
    %p189 = scmp.eq.s32.totalorder %s22, 0
    %p190 = por %p188, %p189
    %p191 = scmp.ne.s32.totalorder %s179, %s180
    %p192 = scmp.eq.s32.totalorder %s23, 2
    %p193 = por %p191, %p192
    %p195 = scmp.ne.s32.totalorder %s180, %s194
    %p196 = scmp.eq.s32.totalorder %s23, 0
    %p197 = por %p195, %p196
    %s199 = sadd.s32 %s198, 1
    %p202 = scmp.eq.s32.totalorder %s17, 2
    %p203 = scmp.ne.s32.totalorder %s198, %s200
    %p204 = scmp.eq.s32.totalorder %s17, 0
    %p205 = por %p203, %p204
    %p206 = scmp.ne.s32.totalorder %s198, %s200
    %p207 = scmp.eq.s32.totalorder %s22, 2
    %p208 = por %p206, %p207
    %p209 = scmp.ne.s32.totalorder %s200, %s201
    %p210 = scmp.eq.s32.totalorder %s22, 0
    %p211 = por %p209, %p210
    %p212 = scmp.ne.s32.totalorder %s200, %s201
    %p213 = scmp.eq.s32.totalorder %s23, 2
    %p214 = por %p212, %p213
    %p216 = scmp.ne.s32.totalorder %s201, %s215
    %p217 = scmp.eq.s32.totalorder %s23, 0
    %p218 = por %p216, %p217
    %s219 = ssub.s32 %s17, %s24
    %p220 = scmp.eq.s32.totalorder %s219, 0
    %s222 = sadd.s32 %s221, 1
    %s223 = scalar_select %p220, %s221, %s222
    %p226 = pneg %p220
    %p227 = scmp.eq.s32.totalorder %s17, 2
    %p228 = por %p226, %p227
    %p229 = scmp.ne.s32.totalorder %s221, %s224
    %p230 = scmp.eq.s32.totalorder %s17, 0
    %p231 = por %p229, %p230
    %p232 = scmp.ne.s32.totalorder %s221, %s224
    %p233 = scmp.eq.s32.totalorder %s22, 2
    %p234 = por %p232, %p233
    %p235 = scmp.ne.s32.totalorder %s224, %s225
    %p236 = scmp.eq.s32.totalorder %s22, 0
    %p237 = por %p235, %p236
    %p238 = scmp.ne.s32.totalorder %s224, %s225
    %p239 = scmp.eq.s32.totalorder %s23, 2
    %p240 = por %p238, %p239
    %p242 = scmp.ne.s32.totalorder %s225, %s241
    %p243 = scmp.eq.s32.totalorder %s23, 0
    %p244 = por %p242, %p243
    %s245 = ssub.s32 %s17, %s24
    %p246 = scmp.eq.s32.totalorder %s245, 0
    %s248 = sadd.s32 %s247, 1
    %s249 = scalar_select %p246, %s247, %s248
    %p252 = pneg %p246
    %p253 = scmp.eq.s32.totalorder %s17, 2
    %p254 = por %p252, %p253
    %p255 = scmp.ne.s32.totalorder %s247, %s250
    %p256 = scmp.eq.s32.totalorder %s17, 0
    %p257 = por %p255, %p256
    %p258 = scmp.ne.s32.totalorder %s247, %s250
    %p259 = scmp.eq.s32.totalorder %s22, 2
    %p260 = por %p258, %p259
    %p261 = scmp.ne.s32.totalorder %s250, %s251
    %p262 = scmp.eq.s32.totalorder %s22, 0
    %p263 = por %p261, %p262
    %p264 = scmp.ne.s32.totalorder %s250, %s251
    %p265 = scmp.eq.s32.totalorder %s23, 2
    %p266 = por %p264, %p265
    %p268 = scmp.ne.s32.totalorder %s251, %s267
    %p269 = scmp.eq.s32.totalorder %s23, 0
    %p270 = por %p268, %p269
    %p271 = scmp.le.s32.totalorder 1, %s17
    %p272 = scmp.lt.s32.totalorder %s17, 4
    %p273 = pnand %p271, %p272
    %p274 = pneg %p273
    // Predicated region
    $region9: #{forward.1} parent=5 // pred_check
      _
    $region10: #{forward.1} parent=5 // pred_check_branch
      %276 = sbr.rel (%p273) target = $region12
    $region11: #{forward.1} parent=5 // pred_region
      %s277 = ssub.s32 %s17, 1
      // Predicated region
      $region13: #{forward.1} parent=11 // pred_check
        %p278 = pneg %p64
      $region14: #{forward.1} parent=11 // pred_check_branch
        %280 = sbr.rel (%p278) target = $region16
      $region15: #{forward.1} parent=11 // pred_region
        _
      $region16: #{forward.1} parent=11 // pred_fallthru
        _
      // Predicated region
      $region17: #{forward.1} parent=11 // pred_check
        %p281 = pneg %p85
      $region18: #{forward.1} parent=11 // pred_check_branch
        %283 = sbr.rel (%p281) target = $region20
      $region19: #{forward.1} parent=11 // pred_region
        _
      $region20: #{forward.1} parent=11 // pred_fallthru
        _
      // Predicated region
      $region21: #{forward.1} parent=11 // pred_check
        %p284 = pneg %p106
      $region22: #{forward.1} parent=11 // pred_check_branch
        %286 = sbr.rel (%p284) target = $region24
      $region23: #{forward.1} parent=11 // pred_region
        _
      $region24: #{forward.1} parent=11 // pred_fallthru
        _
      // Predicated region
      $region25: #{forward.1} parent=11 // pred_check
        %p287 = pneg %p127
      $region26: #{forward.1} parent=11 // pred_check_branch
        %289 = sbr.rel (%p287) target = $region28
      $region27: #{forward.1} parent=11 // pred_region
        _
      $region28: #{forward.1} parent=11 // pred_fallthru
        _
      // Predicated region
      $region29: #{forward.1} parent=11 // pred_check
        %p290 = pneg %p148
      $region30: #{forward.1} parent=11 // pred_check_branch
        %292 = sbr.rel (%p290) target = $region32
      $region31: #{forward.1} parent=11 // pred_region
        _
      $region32: #{forward.1} parent=11 // pred_fallthru
        _
      // Predicated region
      $region33: #{forward.1} parent=11 // pred_check
        %p293 = pneg %p169
      $region34: #{forward.1} parent=11 // pred_check_branch
        %295 = sbr.rel (%p293) target = $region36
      $region35: #{forward.1} parent=11 // pred_region
        _
      $region36: #{forward.1} parent=11 // pred_fallthru
        _
      // Predicated region
      $region37: #{forward.1} parent=11 // pred_check
        %p296 = pneg %p190
      $region38: #{forward.1} parent=11 // pred_check_branch
        %298 = sbr.rel (%p296) target = $region40
      $region39: #{forward.1} parent=11 // pred_region
        _
      $region40: #{forward.1} parent=11 // pred_fallthru
        _
      // Predicated region
      $region41: #{forward.1} parent=11 // pred_check
        %p299 = pneg %p211
      $region42: #{forward.1} parent=11 // pred_check_branch
        %301 = sbr.rel (%p299) target = $region44
      $region43: #{forward.1} parent=11 // pred_region
        _
      $region44: #{forward.1} parent=11 // pred_fallthru
        _
    $region12: #{forward.1} parent=5 // pred_fallthru
      _
    %p302 = scmp.lt.s32.totalorder %s17, 3
    // Predicated region
    $region45: #{forward.1} parent=5 // pred_check
      %p303 = pneg %p302
    $region46: #{forward.1} parent=5 // pred_check_branch
      %305 = sbr.rel (%p303) target = $region48
    $region47: #{forward.1} parent=5 // pred_region
      // Predicated region
      $region49: #{forward.1} parent=47 // pred_check
        %p306 = pneg %p37
      $region50: #{forward.1} parent=47 // pred_check_branch
        %308 = sbr.rel (%p306) target = $region52
      $region51: #{forward.1} parent=47 // pred_region
        %s309 = smul.u32 12, %s17
        %p310 = scmp.lt.s32.totalorder %s309, 35
        %s311 = scalar_select %p310, %s309, 35
        %s312 = smul.addr %s311, 2
        %s313 = smul.addr %s312, 8
        %s314 = scalar_lea.vmem %s0, %s313
        %s315 = smul.u32 12, %s17
      $region52: #{forward.1} parent=47 // pred_fallthru
        _
    $region48: #{forward.1} parent=5 // pred_fallthru
      _
    %p316 = scmp.le.s32.totalorder 1, %s17
    %p317 = scmp.lt.s32.totalorder %s17, 4
    %p318 = pnand %p316, %p317
    %p319 = pneg %p318
    // Predicated region
    $region53: #{forward.1} parent=5 // pred_check
      _
    $region54: #{forward.1} parent=5 // pred_check_branch
      %321 = sbr.rel (%p318) target = $region56
    $region55: #{forward.1} parent=5 // pred_region
      %s322 = ssub.s32 %s17, 1
      %s323 = smul.u32 12, %s22
      %p324 = scmp.lt.s32.totalorder %s323, 35
      %s325 = scalar_select %p324, %s323, 35
      %s326 = smul.addr %s325, 2
      %s327 = smul.addr %s326, 8
      %s328 = scalar_lea.vmem %s0, %s327
      %p329 = pneg %p43
      %p330 = pneg %p40
      %p331 = pneg %p64
      %p332 = pneg %p61
      %p333 = pneg %p85
      %p334 = pneg %p82
      %p335 = pneg %p106
      %p336 = pneg %p103
      %p337 = pneg %p127
      %p338 = pneg %p124
      %p339 = pneg %p148
      %p340 = pneg %p145
      %p341 = pneg %p169
      %p342 = pneg %p166
      %p343 = pneg %p190
      %p344 = pneg %p187
      %p345 = pneg %p211
      %p346 = pneg %p208
      %p347 = pneg %p237
      %p348 = pneg %p234
      %s349 = smul.u32 12, %s22
      %p350 = scmp.lt.s32.totalorder %s349, 35
      %s351 = scalar_select %p350, %s349, 35
      %s352 = smul.addr %s351, 2
      %s353 = smul.addr %s352, 8
      %s354 = scalar_lea.vmem %s9, %s353
      %p355 = pneg %p263
      %p356 = pneg %p260
      %s357 = smul.u32 12, %s22
      %p358 = scmp.lt.s32.totalorder %s357, 35
      %s359 = scalar_select %p358, %s357, 35
      %s360 = smul.addr %s359, 8
      %s361 = scalar_lea.vmem %s10, %s360
      %s362 = smul.u32 12, %s22
      %p363 = scmp.lt.s32.totalorder %s362, 35
      %s364 = scalar_select %p363, %s362, 35
      %s365 = smul.addr %s364, 2
      %s366 = smul.addr %s365, 8
      %s367 = scalar_lea.vmem %s0, %s366
      %s368 = smul.u32 12, %s22
      %s369 = smul.u32 12, %s22
      %p370 = scmp.lt.s32.totalorder %s369, 35
      %s371 = scalar_select %p370, %s369, 35
      %s372 = smul.addr %s371, 2
      %s373 = smul.addr %s372, 8
      %s374 = scalar_lea.vmem %s9, %s373
      %s375 = smul.u32 12, %s22
      %s376 = smul.u32 12, %s22
      %p377 = scmp.lt.s32.totalorder %s376, 35
      %s378 = scalar_select %p377, %s376, 35
      %s379 = smul.addr %s378, 8
      %s380 = scalar_lea.vmem %s10, %s379
      %s381 = smul.u32 12, %s22
      %v383 = vld [vmem:[%s367] sm:$0xff]
      %v384 = vld [vmem:[%s367 + $0x8] sm:$0xff]
      %v385 = vld [vmem:[%s367 + $0x10] sm:$0xff]
      %v386 = vld [vmem:[%s367 + $0x18] sm:$0xff]
      %v387 = vld [vmem:[%s367 + $0x20] sm:$0xff]
      %v388 = vld [vmem:[%s367 + $0x28] sm:$0xff]
      %v389 = vld [vmem:[%s367 + $0x30] sm:$0xff]
      %v390 = vld [vmem:[%s367 + $0x38] sm:$0xff]
      %v391 = vld [vmem:[%s367 + $0x40] sm:$0xff]
      %v392 = vld [vmem:[%s367 + $0x48] sm:$0xff]
      %v393 = vld [vmem:[%s367 + $0x50] sm:$0xff]
      %v394 = vld [vmem:[%s367 + $0x58] sm:$0xff]
      %v395 = vld [vmem:[%s367 + $0x60] sm:$0xff]
      %v396 = vld [vmem:[%s367 + $0x68] sm:$0xff]
      %v397 = vld [vmem:[%s367 + $0x70] sm:$0xff]
      %v398 = vld [vmem:[%s367 + $0x78] sm:$0xff]
      %v399 = vld [vmem:[%s367 + $0x80] sm:$0xff]
      %v400 = vld [vmem:[%s367 + $0x88] sm:$0xff]
      %v401 = vld [vmem:[%s367 + $0x90] sm:$0xff]
      %v402 = vld [vmem:[%s367 + $0x98] sm:$0xff]
      %v403 = vld [vmem:[%s367 + $0xa0] sm:$0xff]
      %v404 = vld [vmem:[%s367 + $0xa8] sm:$0xff]
      %v405 = vld [vmem:[%s367 + $0xb0] sm:$0xff]
      %v406 = vld [vmem:[%s367 + $0xb8] sm:$0xff]
      %v407 = vpack.c.bf16 %v385, %v383
      %v408 = vpack.c.bf16 %v386, %v384
      %v409 = vpack.c.bf16 %v389, %v387
      %v410 = vpack.c.bf16 %v390, %v388
      %v411 = vpack.c.bf16 %v393, %v391
      %v412 = vpack.c.bf16 %v394, %v392
      %v413 = vpack.c.bf16 %v397, %v395
      %v414 = vpack.c.bf16 %v398, %v396
      %v415 = vpack.c.bf16 %v401, %v399
      %v416 = vpack.c.bf16 %v402, %v400
      %v417 = vpack.c.bf16 %v405, %v403
      %v418 = vpack.c.bf16 %v406, %v404
      %v419 = vld [vmem:[%s1] sm:$0xff]
      %v420 = vld [vmem:[%s1 + $0x8] sm:$0xf]
      %v421 = vld [vmem:[%s1 + $0xc] sm:$0xff]
      %v422 = vld [vmem:[%s1 + $0x14] sm:$0xf]
      %v423 = vld [vmem:[%s1 + $0x18] sm:$0xff]
      %v424 = vld [vmem:[%s1 + $0x20] sm:$0xf]
      %v425 = vld [vmem:[%s1 + $0x24] sm:$0xff]
      %v426 = vld [vmem:[%s1 + $0x2c] sm:$0xf]
      %v427 = vld [vmem:[%s1 + $0x30] sm:$0xff]
      %v428 = vld [vmem:[%s1 + $0x38] sm:$0xf]
      %v429 = vld [vmem:[%s1 + $0x3c] sm:$0xff]
      %v430 = vld [vmem:[%s1 + $0x44] sm:$0xf]
      %v431 = vld [vmem:[%s1 + $0x48] sm:$0xff]
      %v432 = vld [vmem:[%s1 + $0x50] sm:$0xf]
      %v433 = vld [vmem:[%s1 + $0x54] sm:$0xff]
      %v434 = vld [vmem:[%s1 + $0x5c] sm:$0xf]
      %v435 = vld [vmem:[%s1 + $0x60] sm:$0xff]
      %v436 = vld [vmem:[%s1 + $0x68] sm:$0xf]
      %v437 = vld [vmem:[%s1 + $0x6c] sm:$0xff]
      %v438 = vld [vmem:[%s1 + $0x74] sm:$0xf]
      %v439 = vld [vmem:[%s1 + $0x78] sm:$0xff]
      %v440 = vld [vmem:[%s1 + $0x80] sm:$0xf]
      %v441 = vld [vmem:[%s1 + $0x84] sm:$0xff]
      %v442 = vld [vmem:[%s1 + $0x8c] sm:$0xf]
      %v443 = vld [vmem:[%s1 + $0x90] sm:$0xff]
      %v444 = vld [vmem:[%s1 + $0x98] sm:$0xf]
      %v445 = vld [vmem:[%s1 + $0x9c] sm:$0xff]
      %v446 = vld [vmem:[%s1 + $0xa4] sm:$0xf]
      %v447 = vld [vmem:[%s1 + $0xa8] sm:$0xff]
      %v448 = vld [vmem:[%s1 + $0xb0] sm:$0xf]
      %v449 = vld [vmem:[%s1 + $0xb4] sm:$0xff]
      %v450 = vld [vmem:[%s1 + $0xbc] sm:$0xf]
      %v451 = vld [vmem:[%s1 + $0xc0] sm:$0xff]
      %v452 = vld [vmem:[%s1 + $0xc8] sm:$0xf]
      %v453 = vld [vmem:[%s1 + $0xcc] sm:$0xff]
      %v454 = vld [vmem:[%s1 + $0xd4] sm:$0xf]
      %v455 = vld [vmem:[%s1 + $0xd8] sm:$0xff]
      %v456 = vld [vmem:[%s1 + $0xe0] sm:$0xf]
      %v457 = vld [vmem:[%s1 + $0xe4] sm:$0xff]
      %v458 = vld [vmem:[%s1 + $0xec] sm:$0xf]
      %v459 = vld [vmem:[%s1 + $0xf0] sm:$0xff]
      %v460 = vld [vmem:[%s1 + $0xf8] sm:$0xf]
      %v461 = vld [vmem:[%s1 + $0xfc] sm:$0xff]
      %v462 = vld [vmem:[%s1 + $0x104] sm:$0xf]
      %v463 = vld [vmem:[%s1 + $0x108] sm:$0xff]
      %v464 = vld [vmem:[%s1 + $0x110] sm:$0xf]
      %v465 = vld [vmem:[%s1 + $0x114] sm:$0xff]
      %v466 = vld [vmem:[%s1 + $0x11c] sm:$0xf]
      %v467 = vld [vmem:[%s1 + $0x120] sm:$0xff]
      %v468 = vld [vmem:[%s1 + $0x128] sm:$0xf]
      %v469 = vld [vmem:[%s1 + $0x12c] sm:$0xff]
      %v470 = vld [vmem:[%s1 + $0x134] sm:$0xf]
      %v471 = vld [vmem:[%s1 + $0x138] sm:$0xff]
      %v472 = vld [vmem:[%s1 + $0x140] sm:$0xf]
      %v473 = vld [vmem:[%s1 + $0x144] sm:$0xff]
      %v474 = vld [vmem:[%s1 + $0x14c] sm:$0xf]
      %v475 = vld [vmem:[%s1 + $0x150] sm:$0xff]
      %v476 = vld [vmem:[%s1 + $0x158] sm:$0xf]
      %v477 = vld [vmem:[%s1 + $0x15c] sm:$0xff]
      %v478 = vld [vmem:[%s1 + $0x164] sm:$0xf]
      %v479 = vld [vmem:[%s1 + $0x168] sm:$0xff]
      %v480 = vld [vmem:[%s1 + $0x170] sm:$0xf]
      %v481 = vld [vmem:[%s1 + $0x174] sm:$0xff]
      %v482 = vld [vmem:[%s1 + $0x17c] sm:$0xf]
      %v483 = vld [vmem:[%s2] sm:$0x7]
      %v485 = vlaneseq
      %v486 = vshrl.u32 %v485, 7
      %v487 = vsub.s32 0, %v486
      %v488 = vrot.slane %v483, %v487
      %v489 = vlaneseq
      %v490 = vshrl.u32 %v489, 7
      %v491 = vsub.s32 1, %v490
      %v492 = vrot.slane %v483, %v491
      %v493 = vlaneseq
      %v494 = vshrl.u32 %v493, 7
      %v495 = vsub.s32 2, %v494
      %v496 = vrot.slane %v483, %v495
      %v564 = vunpack.c.l.b16 %v419
      %v565 = vunpack.c.h.b16 %v419
      %v566 = vunpack.c.l.b16 %v420
      %v567 = vunpack.c.l.b16 %v421
      %v568 = vunpack.c.h.b16 %v421
      %v569 = vunpack.c.l.b16 %v422
      %v570 = vunpack.c.l.b16 %v423
      %v571 = vunpack.c.h.b16 %v423
      %v572 = vunpack.c.l.b16 %v424
      %v573 = vunpack.c.l.b16 %v425
      %v574 = vunpack.c.h.b16 %v425
      %v575 = vunpack.c.l.b16 %v426
      %v576 = vunpack.c.l.b16 %v427
      %v577 = vunpack.c.h.b16 %v427
      %v578 = vunpack.c.l.b16 %v428
      %v579 = vunpack.c.l.b16 %v429
      %v580 = vunpack.c.h.b16 %v429
      %v581 = vunpack.c.l.b16 %v430
      %v582 = vunpack.c.l.b16 %v431
      %v583 = vunpack.c.h.b16 %v431
      %v584 = vunpack.c.l.b16 %v432
      %v585 = vunpack.c.l.b16 %v433
      %v586 = vunpack.c.h.b16 %v433
      %v587 = vunpack.c.l.b16 %v434
      %v588 = vunpack.c.l.b16 %v435
      %v589 = vunpack.c.h.b16 %v435
      %v590 = vunpack.c.l.b16 %v436
      %v591 = vunpack.c.l.b16 %v437
      %v592 = vunpack.c.h.b16 %v437
      %v593 = vunpack.c.l.b16 %v438
      %v594 = vunpack.c.l.b16 %v439
      %v595 = vunpack.c.h.b16 %v439
      %v596 = vunpack.c.l.b16 %v440
      %v597 = vunpack.c.l.b16 %v441
      %v598 = vunpack.c.h.b16 %v441
      %v599 = vunpack.c.l.b16 %v442
      %v600 = vunpack.c.l.b16 %v443
      %v601 = vunpack.c.h.b16 %v443
      %v602 = vunpack.c.l.b16 %v444
      %v603 = vunpack.c.l.b16 %v445
      %v604 = vunpack.c.h.b16 %v445
      %v605 = vunpack.c.l.b16 %v446
      %v606 = vunpack.c.l.b16 %v447
      %v607 = vunpack.c.h.b16 %v447
      %v608 = vunpack.c.l.b16 %v448
      %v609 = vunpack.c.l.b16 %v449
      %v610 = vunpack.c.h.b16 %v449
      %v611 = vunpack.c.l.b16 %v450
      %v612 = vunpack.c.l.b16 %v451
      %v613 = vunpack.c.h.b16 %v451
      %v614 = vunpack.c.l.b16 %v452
      %v615 = vunpack.c.l.b16 %v453
      %v616 = vunpack.c.h.b16 %v453
      %v617 = vunpack.c.l.b16 %v454
      %v618 = vunpack.c.l.b16 %v455
      %v619 = vunpack.c.h.b16 %v455
      %v620 = vunpack.c.l.b16 %v456
      %v621 = vunpack.c.l.b16 %v457
      %v622 = vunpack.c.h.b16 %v457
      %v623 = vunpack.c.l.b16 %v458
      %v624 = vunpack.c.l.b16 %v459
      %v625 = vunpack.c.h.b16 %v459
      %v626 = vunpack.c.l.b16 %v460
      %v627 = vunpack.c.l.b16 %v461
      %v628 = vunpack.c.h.b16 %v461
      %v629 = vunpack.c.l.b16 %v462
      %v630 = vunpack.c.l.b16 %v463
      %v631 = vunpack.c.h.b16 %v463
      %v632 = vunpack.c.l.b16 %v464
      %v633 = vunpack.c.l.b16 %v465
      %v634 = vunpack.c.h.b16 %v465
      %v635 = vunpack.c.l.b16 %v466
      %v636 = vunpack.c.l.b16 %v467
      %v637 = vunpack.c.h.b16 %v467
      %v638 = vunpack.c.l.b16 %v468
      %v639 = vunpack.c.l.b16 %v469
      %v640 = vunpack.c.h.b16 %v469
      %v641 = vunpack.c.l.b16 %v470
      %v642 = vunpack.c.l.b16 %v471
      %v643 = vunpack.c.h.b16 %v471
      %v644 = vunpack.c.l.b16 %v472
      %v645 = vunpack.c.l.b16 %v473
      %v646 = vunpack.c.h.b16 %v473
      %v647 = vunpack.c.l.b16 %v474
      %v648 = vunpack.c.l.b16 %v475
      %v649 = vunpack.c.h.b16 %v475
      %v650 = vunpack.c.l.b16 %v476
      %v651 = vunpack.c.l.b16 %v477
      %v652 = vunpack.c.h.b16 %v477
      %v653 = vunpack.c.l.b16 %v478
      %v654 = vunpack.c.l.b16 %v479
      %v655 = vunpack.c.h.b16 %v479
      %v656 = vunpack.c.l.b16 %v480
      %v657 = vunpack.c.l.b16 %v481
      %v658 = vunpack.c.h.b16 %v481
      %v659 = vunpack.c.l.b16 %v482
      %v660 = vpack.c.b16 %v567, %v564
      %v661 = vpack.c.b16 %v568, %v565
      %v662 = vpack.c.b16 %v569, %v566
      %v663 = vpack.c.b16 %v573, %v570
      %v664 = vpack.c.b16 %v574, %v571
      %v665 = vpack.c.b16 %v575, %v572
      %v666 = vpack.c.b16 %v579, %v576
      %v667 = vpack.c.b16 %v580, %v577
      %v668 = vpack.c.b16 %v581, %v578
      %v669 = vpack.c.b16 %v585, %v582
      %v670 = vpack.c.b16 %v586, %v583
      %v671 = vpack.c.b16 %v587, %v584
      %v672 = vpack.c.b16 %v591, %v588
      %v673 = vpack.c.b16 %v592, %v589
      %v674 = vpack.c.b16 %v593, %v590
      %v675 = vpack.c.b16 %v597, %v594
      %v676 = vpack.c.b16 %v598, %v595
      %v677 = vpack.c.b16 %v599, %v596
      %v678 = vpack.c.b16 %v603, %v600
      %v679 = vpack.c.b16 %v604, %v601
      %v680 = vpack.c.b16 %v605, %v602
      %v681 = vpack.c.b16 %v609, %v606
      %v682 = vpack.c.b16 %v610, %v607
      %v683 = vpack.c.b16 %v611, %v608
      %v684 = vpack.c.b16 %v615, %v612
      %v685 = vpack.c.b16 %v616, %v613
      %v686 = vpack.c.b16 %v617, %v614
      %v687 = vpack.c.b16 %v621, %v618
      %v688 = vpack.c.b16 %v622, %v619
      %v689 = vpack.c.b16 %v623, %v620
      %v690 = vpack.c.b16 %v627, %v624
      %v691 = vpack.c.b16 %v628, %v625
      %v692 = vpack.c.b16 %v629, %v626
      %v693 = vpack.c.b16 %v633, %v630
      %v694 = vpack.c.b16 %v634, %v631
      %v695 = vpack.c.b16 %v635, %v632
      %v696 = vpack.c.b16 %v639, %v636
      %v697 = vpack.c.b16 %v640, %v637
      %v698 = vpack.c.b16 %v641, %v638
      %v699 = vpack.c.b16 %v645, %v642
      %v700 = vpack.c.b16 %v646, %v643
      %v701 = vpack.c.b16 %v647, %v644
      %v702 = vpack.c.b16 %v651, %v648
      %v703 = vpack.c.b16 %v652, %v649
      %v704 = vpack.c.b16 %v653, %v650
      %v705 = vpack.c.b16 %v657, %v654
      %v706 = vpack.c.b16 %v658, %v655
      %v707 = vpack.c.b16 %v659, %v656
      %756 = vmatprep.subr.bf16.mxu0 %v661
      %757 = vmatpush1.bf16.msra.mxu0 %v660
      %758 = vmatprep.subr.bf16.mxu0 %v664
      %759 = vmatpush1.bf16.msra.mxu0 %v663
      %760 = vmatprep.subr.bf16.mxu0 %v667
      %761 = vmatpush1.bf16.msra.mxu0 %v666
      %762 = vmatprep.subr.bf16.mxu0 %v670
      %763 = vmatpush1.bf16.msra.mxu0 %v669
      %764 = vmatprep.subr.bf16.mxu0 %v673
      %765 = vmatpush1.bf16.msra.mxu0 %v672
      %766 = vmatprep.subr.bf16.mxu0 %v676
      %767 = vmatpush1.bf16.msra.mxu0 %v675
      %768 = vmatprep.subr.bf16.mxu0 %v679
      %769 = vmatpush1.bf16.msra.mxu0 %v678
      %770 = vmatprep.subr.bf16.mxu0 %v682
      %771 = vmatpush1.bf16.msra.mxu0 %v681
      %772 = vmatprep.subr.bf16.mxu0 %v685
      %773 = vmatpush1.bf16.msra.mxu0 %v684
      %774 = vmatprep.subr.bf16.mxu0 %v688
      %775 = vmatpush1.bf16.msra.mxu0 %v687
      %776 = vmatprep.subr.bf16.mxu0 %v691
      %777 = vmatpush1.bf16.msra.mxu0 %v690
      %778 = vmatprep.subr.bf16.mxu0 %v694
      %779 = vmatpush1.bf16.msra.mxu0 %v693
      %780 = vmatprep.subr.bf16.mxu0 %v697
      %781 = vmatpush1.bf16.msra.mxu0 %v696
      %782 = vmatprep.subr.bf16.mxu0 %v700
      %783 = vmatpush1.bf16.msra.mxu0 %v699
      %784 = vmatprep.subr.bf16.mxu0 %v703
      %785 = vmatpush1.bf16.msra.mxu0 %v702
      %786 = vmatprep.subr.bf16.mxu0 %v706
      %787 = vmatpush1.bf16.msra.mxu0 %v705
      %788 = vmatprep.mubr.bf16.mxu0 %v408
      %789 = vmatmul.mubr.bf16.gmra.mrb[0].mxu0 %v407
      %v790 = vpop.f32.mrb[0].mxu0
      %v791 = vadd.f32 %v488, %v790
      %v792 = vpop.f32.mrb[0].mxu0
      %v793 = vadd.f32 %v492, %v792
      %v794 = vpop.f32.mrb[0].mxu0
      %v795 = vadd.f32 %v488, %v794
      %v796 = vpop.f32.mrb[0].mxu0
      %v797 = vadd.f32 %v492, %v796
      %798 = vmatprep.mubr.bf16.mxu0 %v410
      %799 = vmatmul.mubr.bf16.gmra.mrb[0].mxu0 %v409
      %v800 = vpop.f32.mrb[0].mxu0
      %v801 = vadd.f32 %v488, %v800
      %v802 = vpop.f32.mrb[0].mxu0
      %v803 = vadd.f32 %v492, %v802
      %v804 = vpop.f32.mrb[0].mxu0
      %v805 = vadd.f32 %v488, %v804
      %v806 = vpop.f32.mrb[0].mxu0
      %v807 = vadd.f32 %v492, %v806
      %808 = vmatprep.mubr.bf16.mxu0 %v412
      %809 = vmatmul.mubr.bf16.gmra.mrb[0].mxu0 %v411
      %v810 = vpop.f32.mrb[0].mxu0
      %v811 = vadd.f32 %v488, %v810
      %v812 = vpop.f32.mrb[0].mxu0
      %v813 = vadd.f32 %v492, %v812
      %v814 = vpop.f32.mrb[0].mxu0
      %v815 = vadd.f32 %v488, %v814
      %v816 = vpop.f32.mrb[0].mxu0
      %v817 = vadd.f32 %v492, %v816
      %818 = vmatprep.mubr.bf16.mxu0 %v414
      %819 = vmatmul.mubr.bf16.gmra.mrb[0].mxu0 %v413
      %v820 = vpop.f32.mrb[0].mxu0
      %v821 = vadd.f32 %v488, %v820
      %v822 = vpop.f32.mrb[0].mxu0
      %v823 = vadd.f32 %v492, %v822
      %v824 = vpop.f32.mrb[0].mxu0
      %v825 = vadd.f32 %v488, %v824
      %v826 = vpop.f32.mrb[0].mxu0
      %v827 = vadd.f32 %v492, %v826
      %828 = vmatprep.mubr.bf16.mxu0 %v416
      %829 = vmatmul.mubr.bf16.gmra.mrb[0].mxu0 %v415
      %v830 = vpop.f32.mrb[0].mxu0
      %v831 = vadd.f32 %v488, %v830
      %v832 = vpop.f32.mrb[0].mxu0
      %v833 = vadd.f32 %v492, %v832
      %v834 = vpop.f32.mrb[0].mxu0
      %v835 = vadd.f32 %v488, %v834
      %v836 = vpop.f32.mrb[0].mxu0
      %v837 = vadd.f32 %v492, %v836
      %838 = vmatprep.mubr.bf16.mxu0 %v418
      %839 = vmatmul.mubr.bf16.gmra.mrb[0].mxu0 %v417
      %v840 = vpop.f32.mrb[0].mxu0
      %v841 = vadd.f32 %v488, %v840
      %v842 = vpop.f32.mrb[0].mxu0
      %v843 = vadd.f32 %v492, %v842
      %v844 = vpop.f32.mrb[0].mxu0
      %v845 = vadd.f32 %v488, %v844
      %v846 = vpop.f32.mrb[0].mxu0
      %v847 = vadd.f32 %v492, %v846
      %848 = vdwg.mxu0
      %849 = vmatprep.subr.bf16.mxu0 0
      %850 = vmatpush1.bf16.msra.mxu0 %v662
      %851 = vmatprep.subr.bf16.mxu0 0
      %852 = vmatpush1.bf16.msra.mxu0 %v665
      %853 = vmatprep.subr.bf16.mxu0 0
      %854 = vmatpush1.bf16.msra.mxu0 %v668
      %855 = vmatprep.subr.bf16.mxu0 0
      %856 = vmatpush1.bf16.msra.mxu0 %v671
      %857 = vmatprep.subr.bf16.mxu0 0
      %858 = vmatpush1.bf16.msra.mxu0 %v674
      %859 = vmatprep.subr.bf16.mxu0 0
      %860 = vmatpush1.bf16.msra.mxu0 %v677
      %861 = vmatprep.subr.bf16.mxu0 0
      %862 = vmatpush1.bf16.msra.mxu0 %v680
      %863 = vmatprep.subr.bf16.mxu0 0
      %864 = vmatpush1.bf16.msra.mxu0 %v683
      %865 = vmatprep.subr.bf16.mxu0 0
      %866 = vmatpush1.bf16.msra.mxu0 %v686
      %867 = vmatprep.subr.bf16.mxu0 0
      %868 = vmatpush1.bf16.msra.mxu0 %v689
      %869 = vmatprep.subr.bf16.mxu0 0
      %870 = vmatpush1.bf16.msra.mxu0 %v692
      %871 = vmatprep.subr.bf16.mxu0 0
      %872 = vmatpush1.bf16.msra.mxu0 %v695
      %873 = vmatprep.subr.bf16.mxu0 0
      %874 = vmatpush1.bf16.msra.mxu0 %v698
      %875 = vmatprep.subr.bf16.mxu0 0
      %876 = vmatpush1.bf16.msra.mxu0 %v701
      %877 = vmatprep.subr.bf16.mxu0 0
      %878 = vmatpush1.bf16.msra.mxu0 %v704
      %879 = vmatprep.subr.bf16.mxu0 0
      %880 = vmatpush1.bf16.msra.mxu0 %v707
      %881 = vmatprep.mubr.bf16.mxu0 %v408
      %882 = vmatmul.mubr.bf16.gmra.mrb[0].mxu0 %v407
      %v883 = vpop.f32.mrb[0].mxu0
      %v884 = vadd.f32 %v496, %v883
      %v885 = vpop.f32.mrb[0].mxu0
      %v886 = vpop.f32.mrb[0].mxu0
      %v887 = vadd.f32 %v496, %v886
      %v888 = vpop.f32.mrb[0].mxu0
      %889 = vmatprep.mubr.bf16.mxu0 %v410
      %890 = vmatmul.mubr.bf16.gmra.mrb[0].mxu0 %v409
      %v891 = vpop.f32.mrb[0].mxu0
      %v892 = vadd.f32 %v496, %v891
      %v893 = vpop.f32.mrb[0].mxu0
      %v894 = vpop.f32.mrb[0].mxu0
      %v895 = vadd.f32 %v496, %v894
      %v896 = vpop.f32.mrb[0].mxu0
      %897 = vmatprep.mubr.bf16.mxu0 %v412
      %898 = vmatmul.mubr.bf16.gmra.mrb[0].mxu0 %v411
      %v899 = vpop.f32.mrb[0].mxu0
      %v900 = vadd.f32 %v496, %v899
      %v901 = vpop.f32.mrb[0].mxu0
      %v902 = vpop.f32.mrb[0].mxu0
      %v903 = vadd.f32 %v496, %v902
      %v904 = vpop.f32.mrb[0].mxu0
      %905 = vmatprep.mubr.bf16.mxu0 %v414
      %906 = vmatmul.mubr.bf16.gmra.mrb[0].mxu0 %v413
      %v907 = vpop.f32.mrb[0].mxu0
      %v908 = vadd.f32 %v496, %v907
      %v909 = vpop.f32.mrb[0].mxu0
      %v910 = vpop.f32.mrb[0].mxu0
      %v911 = vadd.f32 %v496, %v910
      %v912 = vpop.f32.mrb[0].mxu0
      %913 = vmatprep.mubr.bf16.mxu0 %v416
      %914 = vmatmul.mubr.bf16.gmra.mrb[0].mxu0 %v415
      %v915 = vpop.f32.mrb[0].mxu0
      %v916 = vadd.f32 %v496, %v915
      %v917 = vpop.f32.mrb[0].mxu0
      %v918 = vpop.f32.mrb[0].mxu0
      %v919 = vadd.f32 %v496, %v918
      %v920 = vpop.f32.mrb[0].mxu0
      %921 = vmatprep.mubr.bf16.mxu0 %v418
      %922 = vmatmul.mubr.bf16.gmra.mrb[0].mxu0 %v417
      %v923 = vpop.f32.mrb[0].mxu0
      %v924 = vadd.f32 %v496, %v923
      %v925 = vpop.f32.mrb[0].mxu0
      %v926 = vpop.f32.mrb[0].mxu0
      %v927 = vadd.f32 %v496, %v926
      %v928 = vpop.f32.mrb[0].mxu0
      %929 = vdwg.mxu0
      %v930 = vmax.f32 %v791, 0.0
      %v931 = vmax.f32 %v793, 0.0
      %v932 = vmax.f32 %v884, 0.0
      %v933 = vmax.f32 %v795, 0.0
      %v934 = vmax.f32 %v797, 0.0
      %v935 = vmax.f32 %v887, 0.0
      %v936 = vmax.f32 %v801, 0.0
      %v937 = vmax.f32 %v803, 0.0
      %v938 = vmax.f32 %v892, 0.0
      %v939 = vmax.f32 %v805, 0.0
      %v940 = vmax.f32 %v807, 0.0
      %v941 = vmax.f32 %v895, 0.0
      %v942 = vmax.f32 %v811, 0.0
      %v943 = vmax.f32 %v813, 0.0
      %v944 = vmax.f32 %v900, 0.0
      %v945 = vmax.f32 %v815, 0.0
      %v946 = vmax.f32 %v817, 0.0
      %v947 = vmax.f32 %v903, 0.0
      %v948 = vmax.f32 %v821, 0.0
      %v949 = vmax.f32 %v823, 0.0
      %v950 = vmax.f32 %v908, 0.0
      %v951 = vmax.f32 %v825, 0.0
      %v952 = vmax.f32 %v827, 0.0
      %v953 = vmax.f32 %v911, 0.0
      %v954 = vmax.f32 %v831, 0.0
      %v955 = vmax.f32 %v833, 0.0
      %v956 = vmax.f32 %v916, 0.0
      %v957 = vmax.f32 %v835, 0.0
      %v958 = vmax.f32 %v837, 0.0
      %v959 = vmax.f32 %v919, 0.0
      %v960 = vmax.f32 %v841, 0.0
      %v961 = vmax.f32 %v843, 0.0
      %v962 = vmax.f32 %v924, 0.0
      %v963 = vmax.f32 %v845, 0.0
      %v964 = vmax.f32 %v847, 0.0
      %v965 = vmax.f32 %v927, 0.0
      %v966 = vpack.c.bf16 %v933, %v930
      %v967 = vpack.c.bf16 %v934, %v931
      %v968 = vpack.c.bf16 %v935, %v932
      %v969 = vpack.c.bf16 %v939, %v936
      %v970 = vpack.c.bf16 %v940, %v937
      %v971 = vpack.c.bf16 %v941, %v938
      %v972 = vpack.c.bf16 %v945, %v942
      %v973 = vpack.c.bf16 %v946, %v943
      %v974 = vpack.c.bf16 %v947, %v944
      %v975 = vpack.c.bf16 %v951, %v948
      %v976 = vpack.c.bf16 %v952, %v949
      %v977 = vpack.c.bf16 %v953, %v950
      %v978 = vpack.c.bf16 %v957, %v954
      %v979 = vpack.c.bf16 %v958, %v955
      %v980 = vpack.c.bf16 %v959, %v956
      %v981 = vpack.c.bf16 %v963, %v960
      %v982 = vpack.c.bf16 %v964, %v961
      %v983 = vpack.c.bf16 %v965, %v962
      %v984 = vld [vmem:[%s3] sm:$0xf]
      %v985 = vld [vmem:[%s3 + $0x4] sm:$0xf]
      %v986 = vld [vmem:[%s3 + $0x8] sm:$0xf]
      %v987 = vld [vmem:[%s3 + $0xc] sm:$0xf]
      %v988 = vld [vmem:[%s3 + $0x10] sm:$0xf]
      %v989 = vld [vmem:[%s3 + $0x14] sm:$0xf]
      %v990 = vld [vmem:[%s3 + $0x18] sm:$0xf]
      %v991 = vld [vmem:[%s3 + $0x1c] sm:$0xf]
      %v992 = vld [vmem:[%s3 + $0x20] sm:$0xf]
      %v993 = vld [vmem:[%s3 + $0x24] sm:$0xf]
      %v994 = vld [vmem:[%s3 + $0x28] sm:$0xf]
      %v995 = vld [vmem:[%s3 + $0x2c] sm:$0xf]
      %v996 = vld [vmem:[%s3 + $0x30] sm:$0xf]
      %v997 = vld [vmem:[%s3 + $0x34] sm:$0xf]
      %v998 = vld [vmem:[%s3 + $0x38] sm:$0xf]
      %v999 = vld [vmem:[%s3 + $0x3c] sm:$0xf]
      %v1000 = vld [vmem:[%s3 + $0x40] sm:$0xf]
      %v1001 = vld [vmem:[%s3 + $0x44] sm:$0xf]
      %v1002 = vld [vmem:[%s3 + $0x48] sm:$0xf]
      %v1003 = vld [vmem:[%s3 + $0x4c] sm:$0xf]
      %v1004 = vld [vmem:[%s3 + $0x50] sm:$0xf]
      %v1005 = vld [vmem:[%s3 + $0x54] sm:$0xf]
      %v1006 = vld [vmem:[%s3 + $0x58] sm:$0xf]
      %v1007 = vld [vmem:[%s3 + $0x5c] sm:$0xf]
      %v1008 = vld [vmem:[%s3 + $0x60] sm:$0xf]
      %v1009 = vld [vmem:[%s3 + $0x64] sm:$0xf]
      %v1010 = vld [vmem:[%s3 + $0x68] sm:$0xf]
      %v1011 = vld [vmem:[%s3 + $0x6c] sm:$0xf]
      %v1012 = vld [vmem:[%s3 + $0x70] sm:$0xf]
      %v1013 = vld [vmem:[%s3 + $0x74] sm:$0xf]
      %v1014 = vld [vmem:[%s3 + $0x78] sm:$0xf]
      %v1015 = vld [vmem:[%s3 + $0x7c] sm:$0xf]
      %v1016 = vld [vmem:[%s3 + $0x80] sm:$0xf]
      %v1017 = vld [vmem:[%s3 + $0x84] sm:$0xf]
      %v1018 = vld [vmem:[%s3 + $0x88] sm:$0xf]
      %v1019 = vld [vmem:[%s3 + $0x8c] sm:$0xf]
      %v1020 = vld [vmem:[%s3 + $0x90] sm:$0xf]
      %v1021 = vld [vmem:[%s3 + $0x94] sm:$0xf]
      %v1022 = vld [vmem:[%s3 + $0x98] sm:$0xf]
      %v1023 = vld [vmem:[%s3 + $0x9c] sm:$0xf]
      %v1024 = vld [vmem:[%s3 + $0xa0] sm:$0xf]
      %v1025 = vld [vmem:[%s3 + $0xa4] sm:$0xf]
      %v1026 = vld [vmem:[%s3 + $0xa8] sm:$0xf]
      %v1027 = vld [vmem:[%s3 + $0xac] sm:$0xf]
      %v1028 = vld [vmem:[%s3 + $0xb0] sm:$0xf]
      %v1029 = vld [vmem:[%s3 + $0xb4] sm:$0xf]
      %v1030 = vld [vmem:[%s3 + $0xb8] sm:$0xf]
      %v1031 = vld [vmem:[%s3 + $0xbc] sm:$0xf]
      %v1032 = vld [vmem:[%s4] sm:$0x1]
      %v1034 = vlaneseq
      %v1035 = vshrl.u32 %v1034, 7
      %v1036 = vsub.s32 0, %v1035
      %v1037 = vrot.slane %v1032, %v1036
      %v1087 = vunpack.c.l.b16 %v984
      %v1088 = vunpack.c.l.b16 %v985
      %v1089 = vunpack.c.l.b16 %v986
      %v1090 = vunpack.c.l.b16 %v987
      %v1091 = vunpack.c.l.b16 %v988
      %v1092 = vunpack.c.l.b16 %v989
      %v1093 = vunpack.c.l.b16 %v990
      %v1094 = vunpack.c.l.b16 %v991
      %v1095 = vunpack.c.l.b16 %v992
      %v1096 = vunpack.c.l.b16 %v993
      %v1097 = vunpack.c.l.b16 %v994
      %v1098 = vunpack.c.l.b16 %v995
      %v1099 = vunpack.c.l.b16 %v996
      %v1100 = vunpack.c.l.b16 %v997
      %v1101 = vunpack.c.l.b16 %v998
      %v1102 = vunpack.c.l.b16 %v999
      %v1103 = vunpack.c.l.b16 %v1000
      %v1104 = vunpack.c.l.b16 %v1001
      %v1105 = vunpack.c.l.b16 %v1002
      %v1106 = vunpack.c.l.b16 %v1003
      %v1107 = vunpack.c.l.b16 %v1004
      %v1108 = vunpack.c.l.b16 %v1005
      %v1109 = vunpack.c.l.b16 %v1006
      %v1110 = vunpack.c.l.b16 %v1007
      %v1111 = vunpack.c.l.b16 %v1008
      %v1112 = vunpack.c.l.b16 %v1009
      %v1113 = vunpack.c.l.b16 %v1010
      %v1114 = vunpack.c.l.b16 %v1011
      %v1115 = vunpack.c.l.b16 %v1012
      %v1116 = vunpack.c.l.b16 %v1013
      %v1117 = vunpack.c.l.b16 %v1014
      %v1118 = vunpack.c.l.b16 %v1015
      %v1119 = vunpack.c.l.b16 %v1016
      %v1120 = vunpack.c.l.b16 %v1017
      %v1121 = vunpack.c.l.b16 %v1018
      %v1122 = vunpack.c.l.b16 %v1019
      %v1123 = vunpack.c.l.b16 %v1020
      %v1124 = vunpack.c.l.b16 %v1021
      %v1125 = vunpack.c.l.b16 %v1022
      %v1126 = vunpack.c.l.b16 %v1023
      %v1127 = vunpack.c.l.b16 %v1024
      %v1128 = vunpack.c.l.b16 %v1025
      %v1129 = vunpack.c.l.b16 %v1026
      %v1130 = vunpack.c.l.b16 %v1027
      %v1131 = vunpack.c.l.b16 %v1028
      %v1132 = vunpack.c.l.b16 %v1029
      %v1133 = vunpack.c.l.b16 %v1030
      %v1134 = vunpack.c.l.b16 %v1031
      %v1135 = vpack.c.b16 %v1088, %v1087
      %v1136 = vpack.c.b16 %v1090, %v1089
      %v1137 = vpack.c.b16 %v1092, %v1091
      %v1138 = vpack.c.b16 %v1094, %v1093
      %v1139 = vpack.c.b16 %v1096, %v1095
      %v1140 = vpack.c.b16 %v1098, %v1097
      %v1141 = vpack.c.b16 %v1100, %v1099
      %v1142 = vpack.c.b16 %v1102, %v1101
      %v1143 = vpack.c.b16 %v1104, %v1103
      %v1144 = vpack.c.b16 %v1106, %v1105
      %v1145 = vpack.c.b16 %v1108, %v1107
      %v1146 = vpack.c.b16 %v1110, %v1109
      %v1147 = vpack.c.b16 %v1112, %v1111
      %v1148 = vpack.c.b16 %v1114, %v1113
      %v1149 = vpack.c.b16 %v1116, %v1115
      %v1150 = vpack.c.b16 %v1118, %v1117
      %v1151 = vpack.c.b16 %v1120, %v1119
      %v1152 = vpack.c.b16 %v1122, %v1121
      %v1153 = vpack.c.b16 %v1124, %v1123
      %v1154 = vpack.c.b16 %v1126, %v1125
      %v1155 = vpack.c.b16 %v1128, %v1127
      %v1156 = vpack.c.b16 %v1130, %v1129
      %v1157 = vpack.c.b16 %v1132, %v1131
      %v1158 = vpack.c.b16 %v1134, %v1133
      %1183 = vmatprep.subr.bf16.mxu0 0
      %1184 = vmatpush1.bf16.msra.mxu0 %v1135
      %1185 = vmatprep.subr.bf16.mxu0 0
      %1186 = vmatpush1.bf16.msra.mxu0 %v1136
      %1187 = vmatprep.subr.bf16.mxu0 0
      %1188 = vmatpush1.bf16.msra.mxu0 %v1137
      %1189 = vmatprep.subr.bf16.mxu0 0
      %1190 = vmatpush1.bf16.msra.mxu0 %v1138
      %1191 = vmatprep.subr.bf16.mxu0 0
      %1192 = vmatpush1.bf16.msra.mxu0 %v1139
      %1193 = vmatprep.subr.bf16.mxu0 0
      %1194 = vmatpush1.bf16.msra.mxu0 %v1140
      %1195 = vmatprep.subr.bf16.mxu0 0
      %1196 = vmatpush1.bf16.msra.mxu0 %v1141
      %1197 = vmatprep.subr.bf16.mxu0 0
      %1198 = vmatpush1.bf16.msra.mxu0 %v1142
      %1199 = vmatprep.subr.bf16.mxu0 0
      %1200 = vmatpush1.bf16.msra.mxu0 %v1143
      %1201 = vmatprep.subr.bf16.mxu0 0
      %1202 = vmatpush1.bf16.msra.mxu0 %v1144
      %1203 = vmatprep.subr.bf16.mxu0 0
      %1204 = vmatpush1.bf16.msra.mxu0 %v1145
      %1205 = vmatprep.subr.bf16.mxu0 0
      %1206 = vmatpush1.bf16.msra.mxu0 %v1146
      %1207 = vmatprep.subr.bf16.mxu0 0
      %1208 = vmatpush1.bf16.msra.mxu0 %v1147
      %1209 = vmatprep.subr.bf16.mxu0 0
      %1210 = vmatpush1.bf16.msra.mxu0 %v1148
      %1211 = vmatprep.subr.bf16.mxu0 0
      %1212 = vmatpush1.bf16.msra.mxu0 %v1149
      %1213 = vmatprep.subr.bf16.mxu0 0
      %1214 = vmatpush1.bf16.msra.mxu0 %v1150
      %1215 = vmatprep.mubr.bf16.mxu0 %v967
      %1216 = vmatmul.mubr.bf16.gmra.mrb[0].mxu0 %v966
      %v1217 = vpop.f32.mrb[0].mxu0
      %v1218 = vadd.f32 %v1037, %v1217
      %v1219 = vpop.f32.mrb[0].mxu0
      %v1220 = vpop.f32.mrb[0].mxu0
      %v1221 = vadd.f32 %v1037, %v1220
      %v1222 = vpop.f32.mrb[0].mxu0
      %1223 = vmatprep.mubr.bf16.mxu0 %v970
      %1224 = vmatmul.mubr.bf16.gmra.mrb[0].mxu0 %v969
      %v1225 = vpop.f32.mrb[0].mxu0
      %v1226 = vadd.f32 %v1037, %v1225
      %v1227 = vpop.f32.mrb[0].mxu0
      %v1228 = vpop.f32.mrb[0].mxu0
      %v1229 = vadd.f32 %v1037, %v1228
      %v1230 = vpop.f32.mrb[0].mxu0
      %1231 = vmatprep.mubr.bf16.mxu0 %v973
      %1232 = vmatmul.mubr.bf16.gmra.mrb[0].mxu0 %v972
      %v1233 = vpop.f32.mrb[0].mxu0
      %v1234 = vadd.f32 %v1037, %v1233
      %v1235 = vpop.f32.mrb[0].mxu0
      %v1236 = vpop.f32.mrb[0].mxu0
      %v1237 = vadd.f32 %v1037, %v1236
      %v1238 = vpop.f32.mrb[0].mxu0
      %1239 = vmatprep.mubr.bf16.mxu0 %v976
      %1240 = vmatmul.mubr.bf16.gmra.mrb[0].mxu0 %v975
      %v1241 = vpop.f32.mrb[0].mxu0
      %v1242 = vadd.f32 %v1037, %v1241
      %v1243 = vpop.f32.mrb[0].mxu0
      %v1244 = vpop.f32.mrb[0].mxu0
      %v1245 = vadd.f32 %v1037, %v1244
      %v1246 = vpop.f32.mrb[0].mxu0
      %1247 = vmatprep.mubr.bf16.mxu0 %v979
      %1248 = vmatmul.mubr.bf16.gmra.mrb[0].mxu0 %v978
      %v1249 = vpop.f32.mrb[0].mxu0
      %v1250 = vadd.f32 %v1037, %v1249
      %v1251 = vpop.f32.mrb[0].mxu0
      %v1252 = vpop.f32.mrb[0].mxu0
      %v1253 = vadd.f32 %v1037, %v1252
      %v1254 = vpop.f32.mrb[0].mxu0
      %1255 = vmatprep.mubr.bf16.mxu0 %v982
      %1256 = vmatmul.mubr.bf16.gmra.mrb[0].mxu0 %v981
      %v1257 = vpop.f32.mrb[0].mxu0
      %v1258 = vadd.f32 %v1037, %v1257
      %v1259 = vpop.f32.mrb[0].mxu0
      %v1260 = vpop.f32.mrb[0].mxu0
      %v1261 = vadd.f32 %v1037, %v1260
      %v1262 = vpop.f32.mrb[0].mxu0
      %1263 = vdwg.mxu0
      %1264 = vmatprep.subr.bf16.mxu0 0
      %1265 = vmatpush1.bf16.msra.mxu0 %v1151
      %1266 = vmatprep.subr.bf16.mxu0 0
      %1267 = vmatpush1.bf16.msra.mxu0 %v1152
      %1268 = vmatprep.subr.bf16.mxu0 0
      %1269 = vmatpush1.bf16.msra.mxu0 %v1153
      %1270 = vmatprep.subr.bf16.mxu0 0
      %1271 = vmatpush1.bf16.msra.mxu0 %v1154
      %1272 = vmatprep.subr.bf16.mxu0 0
      %1273 = vmatpush1.bf16.msra.mxu0 %v1155
      %1274 = vmatprep.subr.bf16.mxu0 0
      %1275 = vmatpush1.bf16.msra.mxu0 %v1156
      %1276 = vmatprep.subr.bf16.mxu0 0
      %1277 = vmatpush1.bf16.msra.mxu0 %v1157
      %1278 = vmatprep.subr.bf16.mxu0 0
      %1279 = vmatpush1.bf16.msra.mxu0 %v1158
      %1280 = vmatprep.subr.bf16.mxu0 0
      %1281 = vmatpush1.bf16.msra.mxu0 0
      %1282 = vmatprep.subr.bf16.mxu0 0
      %1283 = vmatpush1.bf16.msra.mxu0 0
      %1284 = vmatprep.subr.bf16.mxu0 0
      %1285 = vmatpush1.bf16.msra.mxu0 0
      %1286 = vmatprep.subr.bf16.mxu0 0
      %1287 = vmatpush1.bf16.msra.mxu0 0
      %1288 = vmatprep.subr.bf16.mxu0 0
      %1289 = vmatpush1.bf16.msra.mxu0 0
      %1290 = vmatprep.subr.bf16.mxu0 0
      %1291 = vmatpush1.bf16.msra.mxu0 0
      %1292 = vmatprep.subr.bf16.mxu0 0
      %1293 = vmatpush1.bf16.msra.mxu0 0
      %1294 = vmatprep.subr.bf16.mxu0 0
      %1295 = vmatpush1.bf16.msra.mxu0 0
      %1296 = vmatprep.mubr.bf16.mxu0 0
      %1297 = vmatmul.mubr.bf16.gmra.mrb[0].mxu0 %v968
      %v1298 = vpop.f32.mrb[0].mxu0
      %v1299 = vadd.f32 %v1218, %v1298
      %v1300 = vpop.f32.mrb[0].mxu0
      %v1301 = vpop.f32.mrb[0].mxu0
      %v1302 = vadd.f32 %v1221, %v1301
      %v1303 = vpop.f32.mrb[0].mxu0
      %1304 = vmatprep.mubr.bf16.mxu0 0
      %1305 = vmatmul.mubr.bf16.gmra.mrb[0].mxu0 %v971
      %v1306 = vpop.f32.mrb[0].mxu0
      %v1307 = vadd.f32 %v1226, %v1306
      %v1308 = vpop.f32.mrb[0].mxu0
      %v1309 = vpop.f32.mrb[0].mxu0
      %v1310 = vadd.f32 %v1229, %v1309
      %v1311 = vpop.f32.mrb[0].mxu0
      %1312 = vmatprep.mubr.bf16.mxu0 0
      %1313 = vmatmul.mubr.bf16.gmra.mrb[0].mxu0 %v974
      %v1314 = vpop.f32.mrb[0].mxu0
      %v1315 = vadd.f32 %v1234, %v1314
      %v1316 = vpop.f32.mrb[0].mxu0
      %v1317 = vpop.f32.mrb[0].mxu0
      %v1318 = vadd.f32 %v1237, %v1317
      %v1319 = vpop.f32.mrb[0].mxu0
      %1320 = vmatprep.mubr.bf16.mxu0 0
      %1321 = vmatmul.mubr.bf16.gmra.mrb[0].mxu0 %v977
      %v1322 = vpop.f32.mrb[0].mxu0
      %v1323 = vadd.f32 %v1242, %v1322
      %v1324 = vpop.f32.mrb[0].mxu0
      %v1325 = vpop.f32.mrb[0].mxu0
      %v1326 = vadd.f32 %v1245, %v1325
      %v1327 = vpop.f32.mrb[0].mxu0
      %1328 = vmatprep.mubr.bf16.mxu0 0
      %1329 = vmatmul.mubr.bf16.gmra.mrb[0].mxu0 %v980
      %v1330 = vpop.f32.mrb[0].mxu0
      %v1331 = vadd.f32 %v1250, %v1330
      %v1332 = vpop.f32.mrb[0].mxu0
      %v1333 = vpop.f32.mrb[0].mxu0
      %v1334 = vadd.f32 %v1253, %v1333
      %v1335 = vpop.f32.mrb[0].mxu0
      %1336 = vmatprep.mubr.bf16.mxu0 0
      %1337 = vmatmul.mubr.bf16.gmra.mrb[0].mxu0 %v983
      %v1338 = vpop.f32.mrb[0].mxu0
      %v1339 = vadd.f32 %v1258, %v1338
      %v1340 = vpop.f32.mrb[0].mxu0
      %v1341 = vpop.f32.mrb[0].mxu0
      %v1342 = vadd.f32 %v1261, %v1341
      %v1343 = vpop.f32.mrb[0].mxu0
      %1344 = vdwg.mxu0
      %1345 = vst [vmem:[%s380] sm:$0xff] %v1299
      %1346 = vst [vmem:[%s380 + $0x8] sm:$0xff] %v1302
      %1347 = vst [vmem:[%s380 + $0x10] sm:$0xff] %v1307
      %1348 = vst [vmem:[%s380 + $0x18] sm:$0xff] %v1310
      %1349 = vst [vmem:[%s380 + $0x20] sm:$0xff] %v1315
      %1350 = vst [vmem:[%s380 + $0x28] sm:$0xff] %v1318
      %1351 = vst [vmem:[%s380 + $0x30] sm:$0xff] %v1323
      %1352 = vst [vmem:[%s380 + $0x38] sm:$0xff] %v1326
      %1353 = vst [vmem:[%s380 + $0x40] sm:$0xff] %v1331
      %1354 = vst [vmem:[%s380 + $0x48] sm:$0xff] %v1334
      %1355 = vst [vmem:[%s380 + $0x50] sm:$0xff] %v1339
      %1356 = vst [vmem:[%s380 + $0x58] sm:$0xff] %v1342
      %v1357 = vpack.c.bf16 %v1302, %v1299
      %v1358 = vpack.c.bf16 %v1310, %v1307
      %v1359 = vpack.c.bf16 %v1318, %v1315
      %v1360 = vpack.c.bf16 %v1326, %v1323
      %v1361 = vpack.c.bf16 %v1334, %v1331
      %v1362 = vpack.c.bf16 %v1342, %v1339
      %v1363 = vld [vmem:[%s5] sm:$0xff]
      %v1364 = vld [vmem:[%s5 + $0x8] sm:$0xf]
      %v1365 = vld [vmem:[%s5 + $0xc] sm:$0xff]
      %v1366 = vld [vmem:[%s5 + $0x14] sm:$0xf]
      %v1367 = vld [vmem:[%s5 + $0x18] sm:$0xff]
      %v1368 = vld [vmem:[%s5 + $0x20] sm:$0xf]
      %v1369 = vld [vmem:[%s5 + $0x24] sm:$0xff]
      %v1370 = vld [vmem:[%s5 + $0x2c] sm:$0xf]
      %v1371 = vld [vmem:[%s5 + $0x30] sm:$0xff]
      %v1372 = vld [vmem:[%s5 + $0x38] sm:$0xf]
      %v1373 = vld [vmem:[%s5 + $0x3c] sm:$0xff]
      %v1374 = vld [vmem:[%s5 + $0x44] sm:$0xf]
      %v1375 = vld [vmem:[%s5 + $0x48] sm:$0xff]
      %v1376 = vld [vmem:[%s5 + $0x50] sm:$0xf]
      %v1377 = vld [vmem:[%s5 + $0x54] sm:$0xff]
      %v1378 = vld [vmem:[%s5 + $0x5c] sm:$0xf]
      %v1379 = vld [vmem:[%s5 + $0x60] sm:$0xff]
      %v1380 = vld [vmem:[%s5 + $0x68] sm:$0xf]
      %v1381 = vld [vmem:[%s5 + $0x6c] sm:$0xff]
      %v1382 = vld [vmem:[%s5 + $0x74] sm:$0xf]
      %v1383 = vld [vmem:[%s5 + $0x78] sm:$0xff]
      %v1384 = vld [vmem:[%s5 + $0x80] sm:$0xf]
      %v1385 = vld [vmem:[%s5 + $0x84] sm:$0xff]
      %v1386 = vld [vmem:[%s5 + $0x8c] sm:$0xf]
      %v1387 = vld [vmem:[%s5 + $0x90] sm:$0xff]
      %v1388 = vld [vmem:[%s5 + $0x98] sm:$0xf]
      %v1389 = vld [vmem:[%s5 + $0x9c] sm:$0xff]
      %v1390 = vld [vmem:[%s5 + $0xa4] sm:$0xf]
      %v1391 = vld [vmem:[%s5 + $0xa8] sm:$0xff]
      %v1392 = vld [vmem:[%s5 + $0xb0] sm:$0xf]
      %v1393 = vld [vmem:[%s5 + $0xb4] sm:$0xff]
      %v1394 = vld [vmem:[%s5 + $0xbc] sm:$0xf]
      %v1395 = vld [vmem:[%s6] sm:$0x7]
      %v1397 = vlaneseq
      %v1398 = vshrl.u32 %v1397, 7
      %v1399 = vsub.s32 0, %v1398
      %v1400 = vrot.slane %v1395, %v1399
      %v1401 = vlaneseq
      %v1402 = vshrl.u32 %v1401, 7
      %v1403 = vsub.s32 1, %v1402
      %v1404 = vrot.slane %v1395, %v1403
      %v1405 = vlaneseq
      %v1406 = vshrl.u32 %v1405, 7
      %v1407 = vsub.s32 2, %v1406
      %v1408 = vrot.slane %v1395, %v1407
      %v1444 = vunpack.c.l.b16 %v1363
      %v1445 = vunpack.c.h.b16 %v1363
      %v1446 = vunpack.c.l.b16 %v1364
      %v1447 = vunpack.c.l.b16 %v1365
      %v1448 = vunpack.c.h.b16 %v1365
      %v1449 = vunpack.c.l.b16 %v1366
      %v1450 = vunpack.c.l.b16 %v1367
      %v1451 = vunpack.c.h.b16 %v1367
      %v1452 = vunpack.c.l.b16 %v1368
      %v1453 = vunpack.c.l.b16 %v1369
      %v1454 = vunpack.c.h.b16 %v1369
      %v1455 = vunpack.c.l.b16 %v1370
      %v1456 = vunpack.c.l.b16 %v1371
      %v1457 = vunpack.c.h.b16 %v1371
      %v1458 = vunpack.c.l.b16 %v1372
      %v1459 = vunpack.c.l.b16 %v1373
      %v1460 = vunpack.c.h.b16 %v1373
      %v1461 = vunpack.c.l.b16 %v1374
      %v1462 = vunpack.c.l.b16 %v1375
      %v1463 = vunpack.c.h.b16 %v1375
      %v1464 = vunpack.c.l.b16 %v1376
      %v1465 = vunpack.c.l.b16 %v1377
      %v1466 = vunpack.c.h.b16 %v1377
      %v1467 = vunpack.c.l.b16 %v1378
      %v1468 = vunpack.c.l.b16 %v1379
      %v1469 = vunpack.c.h.b16 %v1379
      %v1470 = vunpack.c.l.b16 %v1380
      %v1471 = vunpack.c.l.b16 %v1381
      %v1472 = vunpack.c.h.b16 %v1381
      %v1473 = vunpack.c.l.b16 %v1382
      %v1474 = vunpack.c.l.b16 %v1383
      %v1475 = vunpack.c.h.b16 %v1383
      %v1476 = vunpack.c.l.b16 %v1384
      %v1477 = vunpack.c.l.b16 %v1385
      %v1478 = vunpack.c.h.b16 %v1385
      %v1479 = vunpack.c.l.b16 %v1386
      %v1480 = vunpack.c.l.b16 %v1387
      %v1481 = vunpack.c.h.b16 %v1387
      %v1482 = vunpack.c.l.b16 %v1388
      %v1483 = vunpack.c.l.b16 %v1389
      %v1484 = vunpack.c.h.b16 %v1389
      %v1485 = vunpack.c.l.b16 %v1390
      %v1486 = vunpack.c.l.b16 %v1391
      %v1487 = vunpack.c.h.b16 %v1391
      %v1488 = vunpack.c.l.b16 %v1392
      %v1489 = vunpack.c.l.b16 %v1393
      %v1490 = vunpack.c.h.b16 %v1393
      %v1491 = vunpack.c.l.b16 %v1394
      %v1492 = vpack.c.b16 %v1447, %v1444
      %v1493 = vpack.c.b16 %v1448, %v1445
      %v1494 = vpack.c.b16 %v1449, %v1446
      %v1495 = vpack.c.b16 %v1453, %v1450
      %v1496 = vpack.c.b16 %v1454, %v1451
      %v1497 = vpack.c.b16 %v1455, %v1452
      %v1498 = vpack.c.b16 %v1459, %v1456
      %v1499 = vpack.c.b16 %v1460, %v1457
      %v1500 = vpack.c.b16 %v1461, %v1458
      %v1501 = vpack.c.b16 %v1465, %v1462
      %v1502 = vpack.c.b16 %v1466, %v1463
      %v1503 = vpack.c.b16 %v1467, %v1464
      %v1504 = vpack.c.b16 %v1471, %v1468
      %v1505 = vpack.c.b16 %v1472, %v1469
      %v1506 = vpack.c.b16 %v1473, %v1470
      %v1507 = vpack.c.b16 %v1477, %v1474
      %v1508 = vpack.c.b16 %v1478, %v1475
      %v1509 = vpack.c.b16 %v1479, %v1476
      %v1510 = vpack.c.b16 %v1483, %v1480
      %v1511 = vpack.c.b16 %v1484, %v1481
      %v1512 = vpack.c.b16 %v1485, %v1482
      %v1513 = vpack.c.b16 %v1489, %v1486
      %v1514 = vpack.c.b16 %v1490, %v1487
      %v1515 = vpack.c.b16 %v1491, %v1488
      %1540 = vmatprep.subr.bf16.mxu0 %v1493
      %1541 = vmatpush1.bf16.msra.mxu0 %v1492
      %1542 = vmatprep.subr.bf16.mxu0 %v1496
      %1543 = vmatpush1.bf16.msra.mxu0 %v1495
      %1544 = vmatprep.subr.bf16.mxu0 %v1499
      %1545 = vmatpush1.bf16.msra.mxu0 %v1498
      %1546 = vmatprep.subr.bf16.mxu0 %v1502
      %1547 = vmatpush1.bf16.msra.mxu0 %v1501
      %1548 = vmatprep.subr.bf16.mxu0 %v1505
      %1549 = vmatpush1.bf16.msra.mxu0 %v1504
      %1550 = vmatprep.subr.bf16.mxu0 %v1508
      %1551 = vmatpush1.bf16.msra.mxu0 %v1507
      %1552 = vmatprep.subr.bf16.mxu0 %v1511
      %1553 = vmatpush1.bf16.msra.mxu0 %v1510
      %1554 = vmatprep.subr.bf16.mxu0 %v1514
      %1555 = vmatpush1.bf16.msra.mxu0 %v1513
      %1556 = vmatprep.subr.bf16.mxu0 0
      %1557 = vmatpush1.bf16.msra.mxu0 0
      %1558 = vmatprep.subr.bf16.mxu0 0
      %1559 = vmatpush1.bf16.msra.mxu0 0
      %1560 = vmatprep.subr.bf16.mxu0 0
      %1561 = vmatpush1.bf16.msra.mxu0 0
      %1562 = vmatprep.subr.bf16.mxu0 0
      %1563 = vmatpush1.bf16.msra.mxu0 0
      %1564 = vmatprep.subr.bf16.mxu0 0
      %1565 = vmatpush1.bf16.msra.mxu0 0
      %1566 = vmatprep.subr.bf16.mxu0 0
      %1567 = vmatpush1.bf16.msra.mxu0 0
      %1568 = vmatprep.subr.bf16.mxu0 0
      %1569 = vmatpush1.bf16.msra.mxu0 0
      %1570 = vmatprep.subr.bf16.mxu0 0
      %1571 = vmatpush1.bf16.msra.mxu0 0
      %1572 = vmatprep.mubr.bf16.mxu0 0
      %1573 = vmatmul.mubr.bf16.gmra.mrb[0].mxu0 %v1357
      %v1574 = vpop.f32.mrb[0].mxu0
      %v1575 = vadd.f32 %v1400, %v1574
      %v1576 = vpop.f32.mrb[0].mxu0
      %v1577 = vadd.f32 %v1404, %v1576
      %v1578 = vpop.f32.mrb[0].mxu0
      %v1579 = vadd.f32 %v1400, %v1578
      %v1580 = vpop.f32.mrb[0].mxu0
      %v1581 = vadd.f32 %v1404, %v1580
      %1582 = vmatprep.mubr.bf16.mxu0 0
      %1583 = vmatmul.mubr.bf16.gmra.mrb[0].mxu0 %v1358
      %v1584 = vpop.f32.mrb[0].mxu0
      %v1585 = vadd.f32 %v1400, %v1584
      %v1586 = vpop.f32.mrb[0].mxu0
      %v1587 = vadd.f32 %v1404, %v1586
      %v1588 = vpop.f32.mrb[0].mxu0
      %v1589 = vadd.f32 %v1400, %v1588
      %v1590 = vpop.f32.mrb[0].mxu0
      %v1591 = vadd.f32 %v1404, %v1590
      %1592 = vmatprep.mubr.bf16.mxu0 0
      %1593 = vmatmul.mubr.bf16.gmra.mrb[0].mxu0 %v1359
      %v1594 = vpop.f32.mrb[0].mxu0
      %v1595 = vadd.f32 %v1400, %v1594
      %v1596 = vpop.f32.mrb[0].mxu0
      %v1597 = vadd.f32 %v1404, %v1596
      %v1598 = vpop.f32.mrb[0].mxu0
      %v1599 = vadd.f32 %v1400, %v1598
      %v1600 = vpop.f32.mrb[0].mxu0
      %v1601 = vadd.f32 %v1404, %v1600
      %1602 = vmatprep.mubr.bf16.mxu0 0
      %1603 = vmatmul.mubr.bf16.gmra.mrb[0].mxu0 %v1360
      %v1604 = vpop.f32.mrb[0].mxu0
      %v1605 = vadd.f32 %v1400, %v1604
      %v1606 = vpop.f32.mrb[0].mxu0
      %v1607 = vadd.f32 %v1404, %v1606
      %v1608 = vpop.f32.mrb[0].mxu0
      %v1609 = vadd.f32 %v1400, %v1608
      %v1610 = vpop.f32.mrb[0].mxu0
      %v1611 = vadd.f32 %v1404, %v1610
      %1612 = vmatprep.mubr.bf16.mxu0 0
      %1613 = vmatmul.mubr.bf16.gmra.mrb[0].mxu0 %v1361
      %v1614 = vpop.f32.mrb[0].mxu0
      %v1615 = vadd.f32 %v1400, %v1614
      %v1616 = vpop.f32.mrb[0].mxu0
      %v1617 = vadd.f32 %v1404, %v1616
      %v1618 = vpop.f32.mrb[0].mxu0
      %v1619 = vadd.f32 %v1400, %v1618
      %v1620 = vpop.f32.mrb[0].mxu0
      %v1621 = vadd.f32 %v1404, %v1620
      %1622 = vmatprep.mubr.bf16.mxu0 0
      %1623 = vmatmul.mubr.bf16.gmra.mrb[0].mxu0 %v1362
      %v1624 = vpop.f32.mrb[0].mxu0
      %v1625 = vadd.f32 %v1400, %v1624
      %v1626 = vpop.f32.mrb[0].mxu0
      %v1627 = vadd.f32 %v1404, %v1626
      %v1628 = vpop.f32.mrb[0].mxu0
      %v1629 = vadd.f32 %v1400, %v1628
      %v1630 = vpop.f32.mrb[0].mxu0
      %v1631 = vadd.f32 %v1404, %v1630
      %1632 = vdwg.mxu0
      %1633 = vmatprep.subr.bf16.mxu0 0
      %1634 = vmatpush1.bf16.msra.mxu0 %v1494
      %1635 = vmatprep.subr.bf16.mxu0 0
      %1636 = vmatpush1.bf16.msra.mxu0 %v1497
      %1637 = vmatprep.subr.bf16.mxu0 0
      %1638 = vmatpush1.bf16.msra.mxu0 %v1500
      %1639 = vmatprep.subr.bf16.mxu0 0
      %1640 = vmatpush1.bf16.msra.mxu0 %v1503
      %1641 = vmatprep.subr.bf16.mxu0 0
      %1642 = vmatpush1.bf16.msra.mxu0 %v1506
      %1643 = vmatprep.subr.bf16.mxu0 0
      %1644 = vmatpush1.bf16.msra.mxu0 %v1509
      %1645 = vmatprep.subr.bf16.mxu0 0
      %1646 = vmatpush1.bf16.msra.mxu0 %v1512
      %1647 = vmatprep.subr.bf16.mxu0 0
      %1648 = vmatpush1.bf16.msra.mxu0 %v1515
      %1649 = vmatprep.subr.bf16.mxu0 0
      %1650 = vmatpush1.bf16.msra.mxu0 0
      %1651 = vmatprep.subr.bf16.mxu0 0
      %1652 = vmatpush1.bf16.msra.mxu0 0
      %1653 = vmatprep.subr.bf16.mxu0 0
      %1654 = vmatpush1.bf16.msra.mxu0 0
      %1655 = vmatprep.subr.bf16.mxu0 0
      %1656 = vmatpush1.bf16.msra.mxu0 0
      %1657 = vmatprep.subr.bf16.mxu0 0
      %1658 = vmatpush1.bf16.msra.mxu0 0
      %1659 = vmatprep.subr.bf16.mxu0 0
      %1660 = vmatpush1.bf16.msra.mxu0 0
      %1661 = vmatprep.subr.bf16.mxu0 0
      %1662 = vmatpush1.bf16.msra.mxu0 0
      %1663 = vmatprep.subr.bf16.mxu0 0
      %1664 = vmatpush1.bf16.msra.mxu0 0
      %1665 = vmatprep.mubr.bf16.mxu0 0
      %1666 = vmatmul.mubr.bf16.gmra.mrb[0].mxu0 %v1357
      %v1667 = vpop.f32.mrb[0].mxu0
      %v1668 = vadd.f32 %v1408, %v1667
      %v1669 = vpop.f32.mrb[0].mxu0
      %v1670 = vpop.f32.mrb[0].mxu0
      %v1671 = vadd.f32 %v1408, %v1670
      %v1672 = vpop.f32.mrb[0].mxu0
      %1673 = vmatprep.mubr.bf16.mxu0 0
      %1674 = vmatmul.mubr.bf16.gmra.mrb[0].mxu0 %v1358
      %v1675 = vpop.f32.mrb[0].mxu0
      %v1676 = vadd.f32 %v1408, %v1675
      %v1677 = vpop.f32.mrb[0].mxu0
      %v1678 = vpop.f32.mrb[0].mxu0
      %v1679 = vadd.f32 %v1408, %v1678
      %v1680 = vpop.f32.mrb[0].mxu0
      %1681 = vmatprep.mubr.bf16.mxu0 0
      %1682 = vmatmul.mubr.bf16.gmra.mrb[0].mxu0 %v1359
      %v1683 = vpop.f32.mrb[0].mxu0
      %v1684 = vadd.f32 %v1408, %v1683
      %v1685 = vpop.f32.mrb[0].mxu0
      %v1686 = vpop.f32.mrb[0].mxu0
      %v1687 = vadd.f32 %v1408, %v1686
      %v1688 = vpop.f32.mrb[0].mxu0
      %1689 = vmatprep.mubr.bf16.mxu0 0
      %1690 = vmatmul.mubr.bf16.gmra.mrb[0].mxu0 %v1360
      %v1691 = vpop.f32.mrb[0].mxu0
      %v1692 = vadd.f32 %v1408, %v1691
      %v1693 = vpop.f32.mrb[0].mxu0
      %v1694 = vpop.f32.mrb[0].mxu0
      %v1695 = vadd.f32 %v1408, %v1694
      %v1696 = vpop.f32.mrb[0].mxu0
      %1697 = vmatprep.mubr.bf16.mxu0 0
      %1698 = vmatmul.mubr.bf16.gmra.mrb[0].mxu0 %v1361
      %v1699 = vpop.f32.mrb[0].mxu0
      %v1700 = vadd.f32 %v1408, %v1699
      %v1701 = vpop.f32.mrb[0].mxu0
      %v1702 = vpop.f32.mrb[0].mxu0
      %v1703 = vadd.f32 %v1408, %v1702
      %v1704 = vpop.f32.mrb[0].mxu0
      %1705 = vmatprep.mubr.bf16.mxu0 0
      %1706 = vmatmul.mubr.bf16.gmra.mrb[0].mxu0 %v1362
      %v1707 = vpop.f32.mrb[0].mxu0
      %v1708 = vadd.f32 %v1408, %v1707
      %v1709 = vpop.f32.mrb[0].mxu0
      %v1710 = vpop.f32.mrb[0].mxu0
      %v1711 = vadd.f32 %v1408, %v1710
      %v1712 = vpop.f32.mrb[0].mxu0
      %1713 = vdwg.mxu0
      %v1714 = vmax.f32 %v1575, 0.0
      %v1715 = vmax.f32 %v1577, 0.0
      %v1716 = vmax.f32 %v1668, 0.0
      %v1717 = vmax.f32 %v1579, 0.0
      %v1718 = vmax.f32 %v1581, 0.0
      %v1719 = vmax.f32 %v1671, 0.0
      %v1720 = vmax.f32 %v1585, 0.0
      %v1721 = vmax.f32 %v1587, 0.0
      %v1722 = vmax.f32 %v1676, 0.0
      %v1723 = vmax.f32 %v1589, 0.0
      %v1724 = vmax.f32 %v1591, 0.0
      %v1725 = vmax.f32 %v1679, 0.0
      %v1726 = vmax.f32 %v1595, 0.0
      %v1727 = vmax.f32 %v1597, 0.0
      %v1728 = vmax.f32 %v1684, 0.0
      %v1729 = vmax.f32 %v1599, 0.0
      %v1730 = vmax.f32 %v1601, 0.0
      %v1731 = vmax.f32 %v1687, 0.0
      %v1732 = vmax.f32 %v1605, 0.0
      %v1733 = vmax.f32 %v1607, 0.0
      %v1734 = vmax.f32 %v1692, 0.0
      %v1735 = vmax.f32 %v1609, 0.0
      %v1736 = vmax.f32 %v1611, 0.0
      %v1737 = vmax.f32 %v1695, 0.0
      %v1738 = vmax.f32 %v1615, 0.0
      %v1739 = vmax.f32 %v1617, 0.0
      %v1740 = vmax.f32 %v1700, 0.0
      %v1741 = vmax.f32 %v1619, 0.0
      %v1742 = vmax.f32 %v1621, 0.0
      %v1743 = vmax.f32 %v1703, 0.0
      %v1744 = vmax.f32 %v1625, 0.0
      %v1745 = vmax.f32 %v1627, 0.0
      %v1746 = vmax.f32 %v1708, 0.0
      %v1747 = vmax.f32 %v1629, 0.0
      %v1748 = vmax.f32 %v1631, 0.0
      %v1749 = vmax.f32 %v1711, 0.0
      %v1750 = vpack.c.bf16 %v1717, %v1714
      %v1751 = vpack.c.bf16 %v1718, %v1715
      %v1752 = vpack.c.bf16 %v1719, %v1716
      %v1753 = vpack.c.bf16 %v1723, %v1720
      %v1754 = vpack.c.bf16 %v1724, %v1721
      %v1755 = vpack.c.bf16 %v1725, %v1722
      %v1756 = vpack.c.bf16 %v1729, %v1726
      %v1757 = vpack.c.bf16 %v1730, %v1727
      %v1758 = vpack.c.bf16 %v1731, %v1728
      %v1759 = vpack.c.bf16 %v1735, %v1732
      %v1760 = vpack.c.bf16 %v1736, %v1733
      %v1761 = vpack.c.bf16 %v1737, %v1734
      %v1762 = vpack.c.bf16 %v1741, %v1738
      %v1763 = vpack.c.bf16 %v1742, %v1739
      %v1764 = vpack.c.bf16 %v1743, %v1740
      %v1765 = vpack.c.bf16 %v1747, %v1744
      %v1766 = vpack.c.bf16 %v1748, %v1745
      %v1767 = vpack.c.bf16 %v1749, %v1746
      %v1768 = vld [vmem:[%s7] sm:$0xff]
      %v1769 = vld [vmem:[%s7 + $0x8] sm:$0xff]
      %v1770 = vld [vmem:[%s7 + $0x10] sm:$0xff]
      %v1771 = vld [vmem:[%s7 + $0x18] sm:$0xff]
      %v1772 = vld [vmem:[%s7 + $0x20] sm:$0xff]
      %v1773 = vld [vmem:[%s7 + $0x28] sm:$0xff]
      %v1774 = vld [vmem:[%s7 + $0x30] sm:$0xff]
      %v1775 = vld [vmem:[%s7 + $0x38] sm:$0xff]
      %v1776 = vld [vmem:[%s7 + $0x40] sm:$0xff]
      %v1777 = vld [vmem:[%s7 + $0x48] sm:$0xff]
      %v1778 = vld [vmem:[%s7 + $0x50] sm:$0xff]
      %v1779 = vld [vmem:[%s7 + $0x58] sm:$0xff]
      %v1780 = vld [vmem:[%s7 + $0x60] sm:$0xff]
      %v1781 = vld [vmem:[%s7 + $0x68] sm:$0xff]
      %v1782 = vld [vmem:[%s7 + $0x70] sm:$0xff]
      %v1783 = vld [vmem:[%s7 + $0x78] sm:$0xff]
      %v1784 = vld [vmem:[%s7 + $0x80] sm:$0xff]
      %v1785 = vld [vmem:[%s7 + $0x88] sm:$0xff]
      %v1786 = vld [vmem:[%s7 + $0x90] sm:$0xff]
      %v1787 = vld [vmem:[%s7 + $0x98] sm:$0xff]
      %v1788 = vld [vmem:[%s7 + $0xa0] sm:$0xff]
      %v1789 = vld [vmem:[%s7 + $0xa8] sm:$0xff]
      %v1790 = vld [vmem:[%s7 + $0xb0] sm:$0xff]
      %v1791 = vld [vmem:[%s7 + $0xb8] sm:$0xff]
      %v1792 = vld [vmem:[%s7 + $0xc0] sm:$0xff]
      %v1793 = vld [vmem:[%s7 + $0xc8] sm:$0xff]
      %v1794 = vld [vmem:[%s7 + $0xd0] sm:$0xff]
      %v1795 = vld [vmem:[%s7 + $0xd8] sm:$0xff]
      %v1796 = vld [vmem:[%s7 + $0xe0] sm:$0xff]
      %v1797 = vld [vmem:[%s7 + $0xe8] sm:$0xff]
      %v1798 = vld [vmem:[%s7 + $0xf0] sm:$0xff]
      %v1799 = vld [vmem:[%s7 + $0xf8] sm:$0xff]
      %v1800 = vld [vmem:[%s7 + $0x100] sm:$0xff]
      %v1801 = vld [vmem:[%s7 + $0x108] sm:$0xff]
      %v1802 = vld [vmem:[%s7 + $0x110] sm:$0xff]
      %v1803 = vld [vmem:[%s7 + $0x118] sm:$0xff]
      %v1804 = vld [vmem:[%s7 + $0x120] sm:$0xff]
      %v1805 = vld [vmem:[%s7 + $0x128] sm:$0xff]
      %v1806 = vld [vmem:[%s7 + $0x130] sm:$0xff]
      %v1807 = vld [vmem:[%s7 + $0x138] sm:$0xff]
      %v1808 = vld [vmem:[%s7 + $0x140] sm:$0xff]
      %v1809 = vld [vmem:[%s7 + $0x148] sm:$0xff]
      %v1810 = vld [vmem:[%s7 + $0x150] sm:$0xff]
      %v1811 = vld [vmem:[%s7 + $0x158] sm:$0xff]
      %v1812 = vld [vmem:[%s7 + $0x160] sm:$0xff]
      %v1813 = vld [vmem:[%s7 + $0x168] sm:$0xff]
      %v1814 = vld [vmem:[%s7 + $0x170] sm:$0xff]
      %v1815 = vld [vmem:[%s7 + $0x178] sm:$0xff]
      %v1816 = vld [vmem:[%s8] sm:$0x3]
      %v1818 = vlaneseq
      %v1819 = vshrl.u32 %v1818, 7
      %v1820 = vsub.s32 0, %v1819
      %v1821 = vrot.slane %v1816, %v1820
      %v1822 = vlaneseq
      %v1823 = vshrl.u32 %v1822, 7
      %v1824 = vsub.s32 1, %v1823
      %v1825 = vrot.slane %v1816, %v1824
      %v1876 = vunpack.c.l.b16 %v1768
      %v1877 = vunpack.c.h.b16 %v1768
      %v1878 = vunpack.c.l.b16 %v1769
      %v1879 = vunpack.c.h.b16 %v1769
      %v1880 = vunpack.c.l.b16 %v1770
      %v1881 = vunpack.c.h.b16 %v1770
      %v1882 = vunpack.c.l.b16 %v1771
      %v1883 = vunpack.c.h.b16 %v1771
      %v1884 = vunpack.c.l.b16 %v1772
      %v1885 = vunpack.c.h.b16 %v1772
      %v1886 = vunpack.c.l.b16 %v1773
      %v1887 = vunpack.c.h.b16 %v1773
      %v1888 = vunpack.c.l.b16 %v1774
      %v1889 = vunpack.c.h.b16 %v1774
      %v1890 = vunpack.c.l.b16 %v1775
      %v1891 = vunpack.c.h.b16 %v1775
      %v1892 = vunpack.c.l.b16 %v1776
      %v1893 = vunpack.c.h.b16 %v1776
      %v1894 = vunpack.c.l.b16 %v1777
      %v1895 = vunpack.c.h.b16 %v1777
      %v1896 = vunpack.c.l.b16 %v1778
      %v1897 = vunpack.c.h.b16 %v1778
      %v1898 = vunpack.c.l.b16 %v1779
      %v1899 = vunpack.c.h.b16 %v1779
      %v1900 = vunpack.c.l.b16 %v1780
      %v1901 = vunpack.c.h.b16 %v1780
      %v1902 = vunpack.c.l.b16 %v1781
      %v1903 = vunpack.c.h.b16 %v1781
      %v1904 = vunpack.c.l.b16 %v1782
      %v1905 = vunpack.c.h.b16 %v1782
      %v1906 = vunpack.c.l.b16 %v1783
      %v1907 = vunpack.c.h.b16 %v1783
      %v1908 = vunpack.c.l.b16 %v1784
      %v1909 = vunpack.c.h.b16 %v1784
      %v1910 = vunpack.c.l.b16 %v1785
      %v1911 = vunpack.c.h.b16 %v1785
      %v1912 = vunpack.c.l.b16 %v1786
      %v1913 = vunpack.c.h.b16 %v1786
      %v1914 = vunpack.c.l.b16 %v1787
      %v1915 = vunpack.c.h.b16 %v1787
      %v1916 = vunpack.c.l.b16 %v1788
      %v1917 = vunpack.c.h.b16 %v1788
      %v1918 = vunpack.c.l.b16 %v1789
      %v1919 = vunpack.c.h.b16 %v1789
      %v1920 = vunpack.c.l.b16 %v1790
      %v1921 = vunpack.c.h.b16 %v1790
      %v1922 = vunpack.c.l.b16 %v1791
      %v1923 = vunpack.c.h.b16 %v1791
      %v1924 = vunpack.c.l.b16 %v1792
      %v1925 = vunpack.c.h.b16 %v1792
      %v1926 = vunpack.c.l.b16 %v1793
      %v1927 = vunpack.c.h.b16 %v1793
      %v1928 = vunpack.c.l.b16 %v1794
      %v1929 = vunpack.c.h.b16 %v1794
      %v1930 = vunpack.c.l.b16 %v1795
      %v1931 = vunpack.c.h.b16 %v1795
      %v1932 = vunpack.c.l.b16 %v1796
      %v1933 = vunpack.c.h.b16 %v1796
      %v1934 = vunpack.c.l.b16 %v1797
      %v1935 = vunpack.c.h.b16 %v1797
      %v1936 = vunpack.c.l.b16 %v1798
      %v1937 = vunpack.c.h.b16 %v1798
      %v1938 = vunpack.c.l.b16 %v1799
      %v1939 = vunpack.c.h.b16 %v1799
      %v1940 = vunpack.c.l.b16 %v1800
      %v1941 = vunpack.c.h.b16 %v1800
      %v1942 = vunpack.c.l.b16 %v1801
      %v1943 = vunpack.c.h.b16 %v1801
      %v1944 = vunpack.c.l.b16 %v1802
      %v1945 = vunpack.c.h.b16 %v1802
      %v1946 = vunpack.c.l.b16 %v1803
      %v1947 = vunpack.c.h.b16 %v1803
      %v1948 = vunpack.c.l.b16 %v1804
      %v1949 = vunpack.c.h.b16 %v1804
      %v1950 = vunpack.c.l.b16 %v1805
      %v1951 = vunpack.c.h.b16 %v1805
      %v1952 = vunpack.c.l.b16 %v1806
      %v1953 = vunpack.c.h.b16 %v1806
      %v1954 = vunpack.c.l.b16 %v1807
      %v1955 = vunpack.c.h.b16 %v1807
      %v1956 = vunpack.c.l.b16 %v1808
      %v1957 = vunpack.c.h.b16 %v1808
      %v1958 = vunpack.c.l.b16 %v1809
      %v1959 = vunpack.c.h.b16 %v1809
      %v1960 = vunpack.c.l.b16 %v1810
      %v1961 = vunpack.c.h.b16 %v1810
      %v1962 = vunpack.c.l.b16 %v1811
      %v1963 = vunpack.c.h.b16 %v1811
      %v1964 = vunpack.c.l.b16 %v1812
      %v1965 = vunpack.c.h.b16 %v1812
      %v1966 = vunpack.c.l.b16 %v1813
      %v1967 = vunpack.c.h.b16 %v1813
      %v1968 = vunpack.c.l.b16 %v1814
      %v1969 = vunpack.c.h.b16 %v1814
      %v1970 = vunpack.c.l.b16 %v1815
      %v1971 = vunpack.c.h.b16 %v1815
      %v1972 = vpack.c.b16 %v1878, %v1876
      %v1973 = vpack.c.b16 %v1879, %v1877
      %v1974 = vpack.c.b16 %v1882, %v1880
      %v1975 = vpack.c.b16 %v1883, %v1881
      %v1976 = vpack.c.b16 %v1886, %v1884
      %v1977 = vpack.c.b16 %v1887, %v1885
      %v1978 = vpack.c.b16 %v1890, %v1888
      %v1979 = vpack.c.b16 %v1891, %v1889
      %v1980 = vpack.c.b16 %v1894, %v1892
      %v1981 = vpack.c.b16 %v1895, %v1893
      %v1982 = vpack.c.b16 %v1898, %v1896
      %v1983 = vpack.c.b16 %v1899, %v1897
      %v1984 = vpack.c.b16 %v1902, %v1900
      %v1985 = vpack.c.b16 %v1903, %v1901
      %v1986 = vpack.c.b16 %v1906, %v1904
      %v1987 = vpack.c.b16 %v1907, %v1905
      %v1988 = vpack.c.b16 %v1910, %v1908
      %v1989 = vpack.c.b16 %v1911, %v1909
      %v1990 = vpack.c.b16 %v1914, %v1912
      %v1991 = vpack.c.b16 %v1915, %v1913
      %v1992 = vpack.c.b16 %v1918, %v1916
      %v1993 = vpack.c.b16 %v1919, %v1917
      %v1994 = vpack.c.b16 %v1922, %v1920
      %v1995 = vpack.c.b16 %v1923, %v1921
      %v1996 = vpack.c.b16 %v1926, %v1924
      %v1997 = vpack.c.b16 %v1927, %v1925
      %v1998 = vpack.c.b16 %v1930, %v1928
      %v1999 = vpack.c.b16 %v1931, %v1929
      %v2000 = vpack.c.b16 %v1934, %v1932
      %v2001 = vpack.c.b16 %v1935, %v1933
      %v2002 = vpack.c.b16 %v1938, %v1936
      %v2003 = vpack.c.b16 %v1939, %v1937
      %v2004 = vpack.c.b16 %v1942, %v1940
      %v2005 = vpack.c.b16 %v1943, %v1941
      %v2006 = vpack.c.b16 %v1946, %v1944
      %v2007 = vpack.c.b16 %v1947, %v1945
      %v2008 = vpack.c.b16 %v1950, %v1948
      %v2009 = vpack.c.b16 %v1951, %v1949
      %v2010 = vpack.c.b16 %v1954, %v1952
      %v2011 = vpack.c.b16 %v1955, %v1953
      %v2012 = vpack.c.b16 %v1958, %v1956
      %v2013 = vpack.c.b16 %v1959, %v1957
      %v2014 = vpack.c.b16 %v1962, %v1960
      %v2015 = vpack.c.b16 %v1963, %v1961
      %v2016 = vpack.c.b16 %v1966, %v1964
      %v2017 = vpack.c.b16 %v1967, %v1965
      %v2018 = vpack.c.b16 %v1970, %v1968
      %v2019 = vpack.c.b16 %v1971, %v1969
      %2068 = vmatprep.subr.bf16.mxu0 %v1973
      %2069 = vmatpush1.bf16.msra.mxu0 %v1972
      %2070 = vmatprep.subr.bf16.mxu0 %v1975
      %2071 = vmatpush1.bf16.msra.mxu0 %v1974
      %2072 = vmatprep.subr.bf16.mxu0 %v1977
      %2073 = vmatpush1.bf16.msra.mxu0 %v1976
      %2074 = vmatprep.subr.bf16.mxu0 %v1979
      %2075 = vmatpush1.bf16.msra.mxu0 %v1978
      %2076 = vmatprep.subr.bf16.mxu0 %v1981
      %2077 = vmatpush1.bf16.msra.mxu0 %v1980
      %2078 = vmatprep.subr.bf16.mxu0 %v1983
      %2079 = vmatpush1.bf16.msra.mxu0 %v1982
      %2080 = vmatprep.subr.bf16.mxu0 %v1985
      %2081 = vmatpush1.bf16.msra.mxu0 %v1984
      %2082 = vmatprep.subr.bf16.mxu0 %v1987
      %2083 = vmatpush1.bf16.msra.mxu0 %v1986
      %2084 = vmatprep.subr.bf16.mxu0 %v1989
      %2085 = vmatpush1.bf16.msra.mxu0 %v1988
      %2086 = vmatprep.subr.bf16.mxu0 %v1991
      %2087 = vmatpush1.bf16.msra.mxu0 %v1990
      %2088 = vmatprep.subr.bf16.mxu0 %v1993
      %2089 = vmatpush1.bf16.msra.mxu0 %v1992
      %2090 = vmatprep.subr.bf16.mxu0 %v1995
      %2091 = vmatpush1.bf16.msra.mxu0 %v1994
      %2092 = vmatprep.subr.bf16.mxu0 %v1997
      %2093 = vmatpush1.bf16.msra.mxu0 %v1996
      %2094 = vmatprep.subr.bf16.mxu0 %v1999
      %2095 = vmatpush1.bf16.msra.mxu0 %v1998
      %2096 = vmatprep.subr.bf16.mxu0 %v2001
      %2097 = vmatpush1.bf16.msra.mxu0 %v2000
      %2098 = vmatprep.subr.bf16.mxu0 %v2003
      %2099 = vmatpush1.bf16.msra.mxu0 %v2002
      %2100 = vmatprep.mubr.bf16.mxu0 %v1751
      %2101 = vmatmul.mubr.bf16.gmra.mrb[0].mxu0 %v1750
      %v2102 = vpop.f32.mrb[0].mxu0
      %v2103 = vadd.f32 %v1821, %v2102
      %v2104 = vpop.f32.mrb[0].mxu0
      %v2105 = vadd.f32 %v1825, %v2104
      %v2106 = vpop.f32.mrb[0].mxu0
      %v2107 = vadd.f32 %v1821, %v2106
      %v2108 = vpop.f32.mrb[0].mxu0
      %v2109 = vadd.f32 %v1825, %v2108
      %2110 = vmatprep.mubr.bf16.mxu0 %v1754
      %2111 = vmatmul.mubr.bf16.gmra.mrb[0].mxu0 %v1753
      %v2112 = vpop.f32.mrb[0].mxu0
      %v2113 = vadd.f32 %v1821, %v2112
      %v2114 = vpop.f32.mrb[0].mxu0
      %v2115 = vadd.f32 %v1825, %v2114
      %v2116 = vpop.f32.mrb[0].mxu0
      %v2117 = vadd.f32 %v1821, %v2116
      %v2118 = vpop.f32.mrb[0].mxu0
      %v2119 = vadd.f32 %v1825, %v2118
      %2120 = vmatprep.mubr.bf16.mxu0 %v1757
      %2121 = vmatmul.mubr.bf16.gmra.mrb[0].mxu0 %v1756
      %v2122 = vpop.f32.mrb[0].mxu0
      %v2123 = vadd.f32 %v1821, %v2122
      %v2124 = vpop.f32.mrb[0].mxu0
      %v2125 = vadd.f32 %v1825, %v2124
      %v2126 = vpop.f32.mrb[0].mxu0
      %v2127 = vadd.f32 %v1821, %v2126
      %v2128 = vpop.f32.mrb[0].mxu0
      %v2129 = vadd.f32 %v1825, %v2128
      %2130 = vmatprep.mubr.bf16.mxu0 %v1760
      %2131 = vmatmul.mubr.bf16.gmra.mrb[0].mxu0 %v1759
      %v2132 = vpop.f32.mrb[0].mxu0
      %v2133 = vadd.f32 %v1821, %v2132
      %v2134 = vpop.f32.mrb[0].mxu0
      %v2135 = vadd.f32 %v1825, %v2134
      %v2136 = vpop.f32.mrb[0].mxu0
      %v2137 = vadd.f32 %v1821, %v2136
      %v2138 = vpop.f32.mrb[0].mxu0
      %v2139 = vadd.f32 %v1825, %v2138
      %2140 = vmatprep.mubr.bf16.mxu0 %v1763
      %2141 = vmatmul.mubr.bf16.gmra.mrb[0].mxu0 %v1762
      %v2142 = vpop.f32.mrb[0].mxu0
      %v2143 = vadd.f32 %v1821, %v2142
      %v2144 = vpop.f32.mrb[0].mxu0
      %v2145 = vadd.f32 %v1825, %v2144
      %v2146 = vpop.f32.mrb[0].mxu0
      %v2147 = vadd.f32 %v1821, %v2146
      %v2148 = vpop.f32.mrb[0].mxu0
      %v2149 = vadd.f32 %v1825, %v2148
      %2150 = vmatprep.mubr.bf16.mxu0 %v1766
      %2151 = vmatmul.mubr.bf16.gmra.mrb[0].mxu0 %v1765
      %v2152 = vpop.f32.mrb[0].mxu0
      %v2153 = vadd.f32 %v1821, %v2152
      %v2154 = vpop.f32.mrb[0].mxu0
      %v2155 = vadd.f32 %v1825, %v2154
      %v2156 = vpop.f32.mrb[0].mxu0
      %v2157 = vadd.f32 %v1821, %v2156
      %v2158 = vpop.f32.mrb[0].mxu0
      %v2159 = vadd.f32 %v1825, %v2158
      %2160 = vdwg.mxu0
      %2161 = vmatprep.subr.bf16.mxu0 %v2005
      %2162 = vmatpush1.bf16.msra.mxu0 %v2004
      %2163 = vmatprep.subr.bf16.mxu0 %v2007
      %2164 = vmatpush1.bf16.msra.mxu0 %v2006
      %2165 = vmatprep.subr.bf16.mxu0 %v2009
      %2166 = vmatpush1.bf16.msra.mxu0 %v2008
      %2167 = vmatprep.subr.bf16.mxu0 %v2011
      %2168 = vmatpush1.bf16.msra.mxu0 %v2010
      %2169 = vmatprep.subr.bf16.mxu0 %v2013
      %2170 = vmatpush1.bf16.msra.mxu0 %v2012
      %2171 = vmatprep.subr.bf16.mxu0 %v2015
      %2172 = vmatpush1.bf16.msra.mxu0 %v2014
      %2173 = vmatprep.subr.bf16.mxu0 %v2017
      %2174 = vmatpush1.bf16.msra.mxu0 %v2016
      %2175 = vmatprep.subr.bf16.mxu0 %v2019
      %2176 = vmatpush1.bf16.msra.mxu0 %v2018
      %2177 = vmatprep.subr.bf16.mxu0 0
      %2178 = vmatpush1.bf16.msra.mxu0 0
      %2179 = vmatprep.subr.bf16.mxu0 0
      %2180 = vmatpush1.bf16.msra.mxu0 0
      %2181 = vmatprep.subr.bf16.mxu0 0
      %2182 = vmatpush1.bf16.msra.mxu0 0
      %2183 = vmatprep.subr.bf16.mxu0 0
      %2184 = vmatpush1.bf16.msra.mxu0 0
      %2185 = vmatprep.subr.bf16.mxu0 0
      %2186 = vmatpush1.bf16.msra.mxu0 0
      %2187 = vmatprep.subr.bf16.mxu0 0
      %2188 = vmatpush1.bf16.msra.mxu0 0
      %2189 = vmatprep.subr.bf16.mxu0 0
      %2190 = vmatpush1.bf16.msra.mxu0 0
      %2191 = vmatprep.subr.bf16.mxu0 0
      %2192 = vmatpush1.bf16.msra.mxu0 0
      %2193 = vmatprep.mubr.bf16.mxu0 0
      %2194 = vmatmul.mubr.bf16.gmra.mrb[0].mxu0 %v1752
      %v2195 = vpop.f32.mrb[0].mxu0
      %v2196 = vadd.f32 %v2103, %v2195
      %v2197 = vpop.f32.mrb[0].mxu0
      %v2198 = vadd.f32 %v2105, %v2197
      %v2199 = vpop.f32.mrb[0].mxu0
      %v2200 = vadd.f32 %v2107, %v2199
      %v2201 = vpop.f32.mrb[0].mxu0
      %v2202 = vadd.f32 %v2109, %v2201
      %2203 = vmatprep.mubr.bf16.mxu0 0
      %2204 = vmatmul.mubr.bf16.gmra.mrb[0].mxu0 %v1755
      %v2205 = vpop.f32.mrb[0].mxu0
      %v2206 = vadd.f32 %v2113, %v2205
      %v2207 = vpop.f32.mrb[0].mxu0
      %v2208 = vadd.f32 %v2115, %v2207
      %v2209 = vpop.f32.mrb[0].mxu0
      %v2210 = vadd.f32 %v2117, %v2209
      %v2211 = vpop.f32.mrb[0].mxu0
      %v2212 = vadd.f32 %v2119, %v2211
      %2213 = vmatprep.mubr.bf16.mxu0 0
      %2214 = vmatmul.mubr.bf16.gmra.mrb[0].mxu0 %v1758
      %v2215 = vpop.f32.mrb[0].mxu0
      %v2216 = vadd.f32 %v2123, %v2215
      %v2217 = vpop.f32.mrb[0].mxu0
      %v2218 = vadd.f32 %v2125, %v2217
      %v2219 = vpop.f32.mrb[0].mxu0
      %v2220 = vadd.f32 %v2127, %v2219
      %v2221 = vpop.f32.mrb[0].mxu0
      %v2222 = vadd.f32 %v2129, %v2221
      %2223 = vmatprep.mubr.bf16.mxu0 0
      %2224 = vmatmul.mubr.bf16.gmra.mrb[0].mxu0 %v1761
      %v2225 = vpop.f32.mrb[0].mxu0
      %v2226 = vadd.f32 %v2133, %v2225
      %v2227 = vpop.f32.mrb[0].mxu0
      %v2228 = vadd.f32 %v2135, %v2227
      %v2229 = vpop.f32.mrb[0].mxu0
      %v2230 = vadd.f32 %v2137, %v2229
      %v2231 = vpop.f32.mrb[0].mxu0
      %v2232 = vadd.f32 %v2139, %v2231
      %2233 = vmatprep.mubr.bf16.mxu0 0
      %2234 = vmatmul.mubr.bf16.gmra.mrb[0].mxu0 %v1764
      %v2235 = vpop.f32.mrb[0].mxu0
      %v2236 = vadd.f32 %v2143, %v2235
      %v2237 = vpop.f32.mrb[0].mxu0
      %v2238 = vadd.f32 %v2145, %v2237
      %v2239 = vpop.f32.mrb[0].mxu0
      %v2240 = vadd.f32 %v2147, %v2239
      %v2241 = vpop.f32.mrb[0].mxu0
      %v2242 = vadd.f32 %v2149, %v2241
      %2243 = vmatprep.mubr.bf16.mxu0 0
      %2244 = vmatmul.mubr.bf16.gmra.mrb[0].mxu0 %v1767
      %v2245 = vpop.f32.mrb[0].mxu0
      %v2246 = vadd.f32 %v2153, %v2245
      %v2247 = vpop.f32.mrb[0].mxu0
      %v2248 = vadd.f32 %v2155, %v2247
      %v2249 = vpop.f32.mrb[0].mxu0
      %v2250 = vadd.f32 %v2157, %v2249
      %v2251 = vpop.f32.mrb[0].mxu0
      %v2252 = vadd.f32 %v2159, %v2251
      %2253 = vdwg.mxu0
      %2254 = vst [vmem:[%s374] sm:$0xff] %v2196
      %2255 = vst [vmem:[%s374 + $0x8] sm:$0xff] %v2198
      %2256 = vst [vmem:[%s374 + $0x10] sm:$0xff] %v2200
      %2257 = vst [vmem:[%s374 + $0x18] sm:$0xff] %v2202
      %2258 = vst [vmem:[%s374 + $0x20] sm:$0xff] %v2206
      %2259 = vst [vmem:[%s374 + $0x28] sm:$0xff] %v2208
      %2260 = vst [vmem:[%s374 + $0x30] sm:$0xff] %v2210
      %2261 = vst [vmem:[%s374 + $0x38] sm:$0xff] %v2212
      %2262 = vst [vmem:[%s374 + $0x40] sm:$0xff] %v2216
      %2263 = vst [vmem:[%s374 + $0x48] sm:$0xff] %v2218
      %2264 = vst [vmem:[%s374 + $0x50] sm:$0xff] %v2220
      %2265 = vst [vmem:[%s374 + $0x58] sm:$0xff] %v2222
      %2266 = vst [vmem:[%s374 + $0x60] sm:$0xff] %v2226
      %2267 = vst [vmem:[%s374 + $0x68] sm:$0xff] %v2228
      %2268 = vst [vmem:[%s374 + $0x70] sm:$0xff] %v2230
      %2269 = vst [vmem:[%s374 + $0x78] sm:$0xff] %v2232
      %2270 = vst [vmem:[%s374 + $0x80] sm:$0xff] %v2236
      %2271 = vst [vmem:[%s374 + $0x88] sm:$0xff] %v2238
      %2272 = vst [vmem:[%s374 + $0x90] sm:$0xff] %v2240
      %2273 = vst [vmem:[%s374 + $0x98] sm:$0xff] %v2242
      %2274 = vst [vmem:[%s374 + $0xa0] sm:$0xff] %v2246
      %2275 = vst [vmem:[%s374 + $0xa8] sm:$0xff] %v2248
      %2276 = vst [vmem:[%s374 + $0xb0] sm:$0xff] %v2250
      %2277 = vst [vmem:[%s374 + $0xb8] sm:$0xff] %v2252
      %s2278 = smul.u32 12, %s22
      %p2279 = scmp.lt.s32.totalorder %s2278, 35
      %s2280 = scalar_select %p2279, %s2278, 35
      %s2281 = smul.addr %s2280, 2
      %s2282 = smul.addr %s2281, 8
      %s2283 = scalar_lea.vmem %s9, %s2282
      %s2284 = smul.u32 12, %s22
      %p2285 = scmp.lt.s32.totalorder %s2284, 35
      %s2286 = scalar_select %p2285, %s2284, 35
      %s2287 = smul.addr %s2286, 8
      %s2288 = scalar_lea.vmem %s10, %s2287
      // Predicated region
      $region57: #{forward.1} parent=55 // pred_check
        %p2289 = pneg %p234
      $region58: #{forward.1} parent=55 // pred_check_branch
        %2291 = sbr.rel (%p2289) target = $region60
      $region59: #{forward.1} parent=55 // pred_region
        %s2292 = smul.u32 12, %s22
      $region60: #{forward.1} parent=55 // pred_fallthru
        _
      // Predicated region
      $region61: #{forward.1} parent=55 // pred_check
        %p2293 = pneg %p260
      $region62: #{forward.1} parent=55 // pred_check_branch
        %2295 = sbr.rel (%p2293) target = $region64
      $region63: #{forward.1} parent=55 // pred_region
        %s2296 = smul.u32 12, %s22
      $region64: #{forward.1} parent=55 // pred_fallthru
        _
    $region56: #{forward.1} parent=5 // pred_fallthru
      _
    %p2297 = scmp.le.s32.totalorder 2, %s17
    // Predicated region
    $region65: #{forward.1} parent=5 // pred_check
      %p2298 = pneg %p2297
    $region66: #{forward.1} parent=5 // pred_check_branch
      %2300 = sbr.rel (%p2298) target = $region68
    $region67: #{forward.1} parent=5 // pred_region
      %s2301 = ssub.s32 %s17, 2
      // Predicated region
      $region69: #{forward.1} parent=67 // pred_check
        %p2302 = pneg %p240
      $region70: #{forward.1} parent=67 // pred_check_branch
        %2304 = sbr.rel (%p2302) target = $region72
      $region71: #{forward.1} parent=67 // pred_region
        %s2305 = smul.u32 12, %s23
        %p2306 = scmp.lt.s32.totalorder %s2305, 35
        %s2307 = scalar_select %p2306, %s2305, 35
        %s2308 = smul.addr %s2307, 2
        %s2309 = smul.addr %s2308, 8
        %s2310 = scalar_lea.vmem %s9, %s2309
      $region72: #{forward.1} parent=67 // pred_fallthru
        _
      // Predicated region
      $region73: #{forward.1} parent=67 // pred_check
        %p2311 = pneg %p266
      $region74: #{forward.1} parent=67 // pred_check_branch
        %2313 = sbr.rel (%p2311) target = $region76
      $region75: #{forward.1} parent=67 // pred_region
        %s2314 = smul.u32 12, %s23
        %p2315 = scmp.lt.s32.totalorder %s2314, 35
        %s2316 = scalar_select %p2315, %s2314, 35
        %s2317 = smul.addr %s2316, 8
        %s2318 = scalar_lea.vmem %s10, %s2317
      $region76: #{forward.1} parent=67 // pred_fallthru
        _
    $region68: #{forward.1} parent=5 // pred_fallthru
      _
  $region6: #{forward.1} parent=0 // loop_footer
    %s21 = sadd.s32 1, %s17
  $region7: #{forward.1} parent=0 // loop_footer_branch
    %16 = sbr.rel target = $region3
  $region8: #{forward.1} parent=0 // loop_exit
    _

</llo_original>
